<compile_context>
chip_gen: v5e
topology: v5e:2x2
jax: 0.10.0
libtpu: 0.0.40
codegen_flags: <defaults>
</compile_context>

<pallas_src>
import functools

import jax
import jax.numpy as jnp
from jax.experimental import pallas as pl
from jax.experimental.pallas import tpu as pltpu

BN_EPS = 1e-5


# ----------------------------------------------------------------------------
# Pallas kernels
# ----------------------------------------------------------------------------
def _conv_bn_relu_kernel(p_ref, w_ref, b_ref, g_ref, beta_ref, o_ref, *, eps):
    """Fused conv-as-matmul + bias + BatchNorm(batch stats) + ReLU.

    p_ref:            (K, M)    bf16  im2col patches, transposed (lane-dense M)
    w_ref:            (Cout, K) bf16  conv weights, transposed
    b_/g_/beta_ref:   (Cout, 1) f32   conv bias, BN gamma, BN beta
    o_ref:            (Cout, M) f32
    """
    acc = jnp.dot(w_ref[...], p_ref[...],
                  preferred_element_type=jnp.float32)            # (Cout, M) f32
    acc = acc + b_ref[...]                                       # conv bias
    mean = jnp.mean(acc, axis=1, keepdims=True)                  # (Cout, 1)
    var = jnp.mean(jnp.square(acc - mean), axis=1, keepdims=True)
    scale = g_ref[...] * jax.lax.rsqrt(var + eps)
    y = (acc - mean) * scale + beta_ref[...]
    o_ref[...] = jnp.maximum(y, 0.0).astype(o_ref.dtype)


def _mlp_head_kernel(*refs, n_blocks, eps):
    """Fused MLP head: n_blocks x (Linear + BatchNorm1d + ReLU) + Linear.

    refs = x, [w, b, gamma, beta] * n_blocks, w_out, b_out, o_ref
    x: (B, F0) f32; w: (Fin, Fout) bf16; b/gamma/beta: (1, Fout) f32.
    """
    x_ref, o_ref = refs[0], refs[-1]
    h = x_ref[...].astype(jnp.float32)
    idx = 1
    for _ in range(n_blocks):
        w_r, b_r, g_r, be_r = refs[idx:idx + 4]
        idx += 4
        y = jnp.dot(h.astype(jnp.bfloat16), w_r[...],
                    preferred_element_type=jnp.float32) + b_r[...]
        mean = jnp.mean(y, axis=0, keepdims=True)                # over batch
        var = jnp.mean(jnp.square(y - mean), axis=0, keepdims=True)
        y = (y - mean) * (g_r[...] * jax.lax.rsqrt(var + eps)) + be_r[...]
        h = jnp.maximum(y, 0.0)
    wo_r, bo_r = refs[idx], refs[idx + 1]
    out = jnp.dot(h.astype(jnp.bfloat16), wo_r[...],
                  preferred_element_type=jnp.float32) + bo_r[...]
    o_ref[...] = out.astype(o_ref.dtype)


# ----------------------------------------------------------------------------
# Pallas wrappers
# ----------------------------------------------------------------------------
def _full(shape):
    # Whole-array block (block_shape == array shape satisfies the (8,128) rule).
    return pl.BlockSpec(shape, lambda i: (0,) * len(shape))


def conv_bn_relu_T(patches_T, w_T, bias, gamma, beta, *, eps=BN_EPS):
    """yT = relu(BN(wT @ patchesT + bias)), lane-dense output (Cout, M)."""
    K, M = patches_T.shape
    cout = w_T.shape[0]
    kernel = functools.partial(_conv_bn_relu_kernel, eps=eps)
    return pl.pallas_call(
        kernel,
        out_shape=jax.ShapeDtypeStruct((cout, M), jnp.float32),
        grid=(1,),
        in_specs=[_full((K, M)), _full((cout, K)),
                  _full((cout, 1)), _full((cout, 1)), _full((cout, 1))],
        out_specs=_full((cout, M)),
        compiler_params=pltpu.CompilerParams(
            dimension_semantics=("arbitrary",)),
    )(patches_T.astype(jnp.bfloat16), w_T.astype(jnp.bfloat16),
      bias.reshape(cout, 1).astype(jnp.float32),
      gamma.reshape(cout, 1).astype(jnp.float32),
      beta.reshape(cout, 1).astype(jnp.float32))


def mlp_head(x, linear_params, out_params, *, eps=BN_EPS):
    """All Linear+BN1d+ReLU blocks + output Linear in a single pallas_call."""
    B, F0 = x.shape
    args = [x.astype(jnp.float32)]
    in_specs = [_full((B, F0))]
    for (w, b, gamma, beta) in linear_params:            # w is PyTorch (out, in)
        fout, fin = w.shape
        args += [jnp.transpose(w).astype(jnp.bfloat16),
                 b.reshape(1, fout).astype(jnp.float32),
                 gamma.reshape(1, fout).astype(jnp.float32),
                 beta.reshape(1, fout).astype(jnp.float32)]
        in_specs += [_full((fin, fout)), _full((1, fout)),
                     _full((1, fout)), _full((1, fout))]
    wo, bo = out_params
    nout, nin = wo.shape
    args += [jnp.transpose(wo).astype(jnp.bfloat16),
             bo.reshape(1, nout).astype(jnp.float32)]
    in_specs += [_full((nin, nout)), _full((1, nout))]

    kernel = functools.partial(_mlp_head_kernel,
                               n_blocks=len(linear_params), eps=eps)
    return pl.pallas_call(
        kernel,
        out_shape=jax.ShapeDtypeStruct((B, nout), jnp.float32),
        grid=(1,),
        in_specs=in_specs,
        out_specs=_full((B, nout)),
        compiler_params=pltpu.CompilerParams(
            dimension_semantics=("arbitrary",)),
    )(*args)


# ----------------------------------------------------------------------------
# Glue: transposed im2col, max-pool, conv block
# ----------------------------------------------------------------------------
def im2col_3d_T(x, k=3, stride=1, pad=1):
    """x: (N, D, H, W, C) -> (k^3*C, N*Do*Ho*Wo); row order (kd, kh, kw, cin)."""
    N, D, H, W, C = x.shape
    xp = jnp.pad(x, ((0, 0), (pad, pad), (pad, pad), (pad, pad), (0, 0)))
    Do = (D + 2 * pad - k) // stride + 1
    Ho = (H + 2 * pad - k) // stride + 1
    Wo = (W + 2 * pad - k) // stride + 1
    taps = []
    for kd in range(k):
        for kh in range(k):
            for kw in range(k):
                taps.append(xp[:, kd:kd + Do * stride:stride,
                               kh:kh + Ho * stride:stride,
                               kw:kw + Wo * stride:stride, :])
    p = jnp.stack(taps, axis=0)                  # (k^3, N, Do, Ho, Wo, C)
    p = jnp.moveaxis(p, -1, 1)                   # (k^3, C, N, Do, Ho, Wo)
    return p.reshape(k * k * k * C, N * Do * Ho * Wo), (N, Do, Ho, Wo)


def conv_block(x_ndhwc, w, b, gamma, beta):
    """Conv3d(k3,s1,p1) + BN3d + ReLU (fused Pallas) + MaxPool3d(2,2) (glue)."""
    cout = w.shape[0]
    patches_T, (N, Do, Ho, Wo) = im2col_3d_T(x_ndhwc.astype(jnp.bfloat16))
    w_T = jnp.transpose(w, (0, 2, 3, 4, 1)).reshape(cout, -1)  # (Cout, 27*Cin)
    yT = conv_bn_relu_T(patches_T, w_T, b, gamma, beta)        # (Cout, M) f32
    # MaxPool3d(kernel=2, stride=2): M is flattened (N, Do, Ho, Wo).
    y = yT.reshape(cout, N, Do // 2, 2, Ho // 2, 2, Wo // 2, 2)
    y = jnp.max(y, axis=(3, 5, 7))               # (Cout, N, Do/2, Ho/2, Wo/2)
    return jnp.transpose(y, (1, 2, 3, 4, 0))     # NDHWC for the next layer


# ----------------------------------------------------------------------------
# Model: parameters + forward
# ----------------------------------------------------------------------------
CHANNEL_SIZE = 2
DEPTH_SIZE = 8
SPATIAL = 16
OUT_CHANNELS = 3
CONV_CHANNELS = [CHANNEL_SIZE, 4, OUT_CHANNELS]   # conv0: 2->4, conv1: 4->3
LINEAR_SIZES = [96, 64, 32]                       # 96 = 3*2*4*4 after 2 pools
OUTPUT_SIZE = 16


def make_params(key):
    params = {"conv": [], "linear": []}
    k = key
    for cin, cout in zip(CONV_CHANNELS[:-1], CONV_CHANNELS[1:]):
        k, kw_ = jax.random.split(k)
        std = (2.0 / (cin * 27)) ** 0.5  # kaiming-normal fan_in
        w = jax.random.normal(kw_, (cout, cin, 3, 3, 3), jnp.float32) * std
        b = jnp.zeros((cout,), jnp.float32)
        gamma = jnp.ones((cout,), jnp.float32)
        beta = jnp.zeros((cout,), jnp.float32)
        params["conv"].append((w, b, gamma, beta))
    for fin, fout in zip(LINEAR_SIZES[:-1], LINEAR_SIZES[1:]):
        k, kw_ = jax.random.split(k)
        std = (2.0 / fin) ** 0.5
        w = jax.random.normal(kw_, (fout, fin), jnp.float32) * std  # (out, in)
        b = jnp.zeros((fout,), jnp.float32)
        gamma = jnp.ones((fout,), jnp.float32)
        beta = jnp.zeros((fout,), jnp.float32)
        params["linear"].append((w, b, gamma, beta))
    k, kw_ = jax.random.split(k)
    std = (2.0 / LINEAR_SIZES[-1]) ** 0.5
    params["out"] = (
        jax.random.normal(kw_, (OUTPUT_SIZE, LINEAR_SIZES[-1]), jnp.float32) * std,
        jnp.zeros((OUTPUT_SIZE,), jnp.float32),
    )
    return params


def cnn3d_encoder_forward(params, x_ncdhw):
    # PyTorch NCDHW -> NDHWC (channels-last) for the conv stack.
    x = jnp.transpose(x_ncdhw, (0, 2, 3, 4, 1)).astype(jnp.float32)

    # Conv blocks: Conv3d -> BatchNorm3d -> ReLU -> MaxPool3d(2,2), each fused
    # into one Pallas kernel (pool + layout plumbing in glue).
    for (w, b, gamma, beta) in params["conv"]:
        x = conv_block(x, w, b, gamma, beta)

    # Flatten exactly as PyTorch: (N, C, D, H, W) row-major feature order.
    N = x.shape[0]
    x = jnp.transpose(x, (0, 4, 1, 2, 3)).reshape(N, -1)

    # Entire MLP head in a single fused Pallas kernel.
    return mlp_head(x, params["linear"], params["out"])


if __name__ == "__main__":
    key = jax.random.PRNGKey(0)
    kx, kp = jax.random.split(key)
    # PyTorch NCDHW input: (batch=2, channels=2, depth=8, 16, 16)
    x = jax.random.normal(kx, (2, CHANNEL_SIZE, DEPTH_SIZE, SPATIAL, SPATIAL),
                          jnp.float32)
    params = make_params(kp)

    out = jax.jit(cnn3d_encoder_forward)(params, x)
    out = jax.block_until_ready(out)

    assert out.shape == (2, OUTPUT_SIZE), out.shape
    assert bool(jnp.all(jnp.isfinite(out)))
    print("KERNEL_OK")
</pallas_src>

<mosaic_0001>
module attributes {stable_mosaic.version = 11 : i64} {
  func.func @_conv_bn_relu_kernel(%arg0: i32, %arg1: memref<54x4096xbf16, #tpu.memory_space<vmem>>, %arg2: memref<4x54xbf16, #tpu.memory_space<vmem>>, %arg3: memref<4x1xf32, #tpu.memory_space<vmem>>, %arg4: memref<4x1xf32, #tpu.memory_space<vmem>>, %arg5: memref<4x1xf32, #tpu.memory_space<vmem>>, %arg6: memref<4x4096xf32, #tpu.memory_space<vmem>>) attributes {dimension_semantics = [#tpu.dimension_semantics<arbitrary>], iteration_bounds = array<i64: 1>, scalar_prefetch = 0 : i64, scratch_operands = 0 : i64, tpu.core_type = #tpu.core_type<tc>, window_params = [{pipeline_mode = #tpu.pipeline_mode<synchronous>, transform_indices = @transform_0, window_bounds = array<i64: 54, 4096>}, {pipeline_mode = #tpu.pipeline_mode<synchronous>, transform_indices = @transform_1, window_bounds = array<i64: 4, 54>}, {pipeline_mode = #tpu.pipeline_mode<synchronous>, transform_indices = @transform_2, window_bounds = array<i64: 4, 1>}, {pipeline_mode = #tpu.pipeline_mode<synchronous>, transform_indices = @transform_3, window_bounds = array<i64: 4, 1>}, {pipeline_mode = #tpu.pipeline_mode<synchronous>, transform_indices = @transform_4, window_bounds = array<i64: 4, 1>}, {pipeline_mode = #tpu.pipeline_mode<synchronous>, transform_indices = @transform_5, window_bounds = array<i64: 4, 4096>}]} {
    %c0 = arith.constant 0 : index
    %c0_0 = arith.constant 0 : index
    %0 = vector.load %arg2[%c0, %c0_0] : memref<4x54xbf16, #tpu.memory_space<vmem>>, vector<4x54xbf16>
    %c0_1 = arith.constant 0 : index
    %c0_2 = arith.constant 0 : index
    %1 = vector.load %arg1[%c0_1, %c0_2] : memref<54x4096xbf16, #tpu.memory_space<vmem>>, vector<54x4096xbf16>
    %cst = arith.constant dense<0.000000e+00> : vector<4x4096xf32>
    %2 = tpu.matmul %0, %1, %cst {dimension_numbers = #tpu.dot_dimension_numbers<[1], [0], [0], [1], [0, 0, 1, 1], [], []>} : vector<4x54xbf16>, vector<54x4096xbf16>, vector<4x4096xf32> -> vector<4x4096xf32>
    %c0_3 = arith.constant 0 : index
    %c0_4 = arith.constant 0 : index
    %3 = vector.load %arg3[%c0_3, %c0_4] : memref<4x1xf32, #tpu.memory_space<vmem>>, vector<4x1xf32>
    %4 = vector.broadcast %3 : vector<4x1xf32> to vector<4x4096xf32>
    %5 = arith.addf %2, %4 : vector<4x4096xf32>
    %cst_5 = arith.constant dense<0.000000e+00> : vector<4xf32>
    %6 = vector.multi_reduction <add>, %5, %cst_5 [1] : vector<4x4096xf32> to vector<4xf32>
    %7 = vector.shape_cast %6 : vector<4xf32> to vector<4x1xf32>
    %cst_6 = arith.constant 4.096000e+03 : f32
    %8 = vector.broadcast %cst_6 : f32 to vector<4x1xf32>
    %9 = arith.divf %7, %8 : vector<4x1xf32>
    %10 = vector.broadcast %9 : vector<4x1xf32> to vector<4x4096xf32>
    %11 = arith.subf %5, %10 : vector<4x4096xf32>
    %12 = arith.mulf %11, %11 : vector<4x4096xf32>
    %cst_7 = arith.constant dense<0.000000e+00> : vector<4xf32>
    %13 = vector.multi_reduction <add>, %12, %cst_7 [1] : vector<4x4096xf32> to vector<4xf32>
    %14 = vector.shape_cast %13 : vector<4xf32> to vector<4x1xf32>
    %cst_8 = arith.constant 4.096000e+03 : f32
    %15 = vector.broadcast %cst_8 : f32 to vector<4x1xf32>
    %16 = arith.divf %14, %15 : vector<4x1xf32>
    %c0_9 = arith.constant 0 : index
    %c0_10 = arith.constant 0 : index
    %17 = vector.load %arg4[%c0_9, %c0_10] : memref<4x1xf32, #tpu.memory_space<vmem>>, vector<4x1xf32>
    %cst_11 = arith.constant 9.99999974E-6 : f32
    %18 = vector.broadcast %cst_11 : f32 to vector<4x1xf32>
    %19 = arith.addf %16, %18 : vector<4x1xf32>
    %20 = math.rsqrt %19 : vector<4x1xf32>
    %21 = arith.mulf %17, %20 : vector<4x1xf32>
    %22 = vector.broadcast %9 : vector<4x1xf32> to vector<4x4096xf32>
    %23 = arith.subf %5, %22 : vector<4x4096xf32>
    %24 = vector.broadcast %21 : vector<4x1xf32> to vector<4x4096xf32>
    %25 = arith.mulf %23, %24 : vector<4x4096xf32>
    %c0_12 = arith.constant 0 : index
    %c0_13 = arith.constant 0 : index
    %26 = vector.load %arg5[%c0_12, %c0_13] : memref<4x1xf32, #tpu.memory_space<vmem>>, vector<4x1xf32>
    %27 = vector.broadcast %26 : vector<4x1xf32> to vector<4x4096xf32>
    %28 = arith.addf %25, %27 : vector<4x4096xf32>
    %cst_14 = arith.constant 0.000000e+00 : f32
    %29 = vector.broadcast %cst_14 : f32 to vector<4x4096xf32>
    %30 = arith.maximumf %28, %29 : vector<4x4096xf32>
    %c0_15 = arith.constant 0 : index
    %c0_16 = arith.constant 0 : index
    %31 = vector.load %arg6[%c0_15, %c0_16] : memref<4x4096xf32, #tpu.memory_space<vmem>>, vector<4x4096xf32>
    tpu.vector_store %arg6[%c0_15, %c0_16], %30 {strides = array<i32>} : memref<4x4096xf32, #tpu.memory_space<vmem>>, vector<4x4096xf32>,
    return
  }
  func.func @transform_0(%arg0: i32) -> (i32, i32) {
    %c0_i32 = arith.constant 0 : i32
    %c0_i32_0 = arith.constant 0 : i32
    %c0_i32_1 = arith.constant 0 : i32
    return %c0_i32, %c0_i32_0 : i32, i32
  }
  func.func @transform_1(%arg0: i32) -> (i32, i32) {
    %c0_i32 = arith.constant 0 : i32
    %c0_i32_0 = arith.constant 0 : i32
    %c0_i32_1 = arith.constant 0 : i32
    return %c0_i32, %c0_i32_0 : i32, i32
  }
  func.func @transform_2(%arg0: i32) -> (i32, i32) {
    %c0_i32 = arith.constant 0 : i32
    %c0_i32_0 = arith.constant 0 : i32
    %c0_i32_1 = arith.constant 0 : i32
    return %c0_i32, %c0_i32_0 : i32, i32
  }
  func.func @transform_3(%arg0: i32) -> (i32, i32) {
    %c0_i32 = arith.constant 0 : i32
    %c0_i32_0 = arith.constant 0 : i32
    %c0_i32_1 = arith.constant 0 : i32
    return %c0_i32, %c0_i32_0 : i32, i32
  }
  func.func @transform_4(%arg0: i32) -> (i32, i32) {
    %c0_i32 = arith.constant 0 : i32
    %c0_i32_0 = arith.constant 0 : i32
    %c0_i32_1 = arith.constant 0 : i32
    return %c0_i32, %c0_i32_0 : i32, i32
  }
  func.func @transform_5(%arg0: i32) -> (i32, i32) {
    %c0_i32 = arith.constant 0 : i32
    %c0_i32_0 = arith.constant 0 : i32
    %c0_i32_1 = arith.constant 0 : i32
    return %c0_i32, %c0_i32_0 : i32, i32
  }
}

module attributes {stable_mosaic.version = 11 : i64} {
  func.func @_conv_bn_relu_kernel(%arg0: i32, %arg1: memref<108x512xbf16, #tpu.memory_space<vmem>>, %arg2: memref<3x108xbf16, #tpu.memory_space<vmem>>, %arg3: memref<3x1xf32, #tpu.memory_space<vmem>>, %arg4: memref<3x1xf32, #tpu.memory_space<vmem>>, %arg5: memref<3x1xf32, #tpu.memory_space<vmem>>, %arg6: memref<3x512xf32, #tpu.memory_space<vmem>>) attributes {dimension_semantics = [#tpu.dimension_semantics<arbitrary>], iteration_bounds = array<i64: 1>, scalar_prefetch = 0 : i64, scratch_operands = 0 : i64, tpu.core_type = #tpu.core_type<tc>, window_params = [{pipeline_mode = #tpu.pipeline_mode<synchronous>, transform_indices = @transform_0, window_bounds = array<i64: 108, 512>}, {pipeline_mode = #tpu.pipeline_mode<synchronous>, transform_indices = @transform_1, window_bounds = array<i64: 3, 108>}, {pipeline_mode = #tpu.pipeline_mode<synchronous>, transform_indices = @transform_2, window_bounds = array<i64: 3, 1>}, {pipeline_mode = #tpu.pipeline_mode<synchronous>, transform_indices = @transform_3, window_bounds = array<i64: 3, 1>}, {pipeline_mode = #tpu.pipeline_mode<synchronous>, transform_indices = @transform_4, window_bounds = array<i64: 3, 1>}, {pipeline_mode = #tpu.pipeline_mode<synchronous>, transform_indices = @transform_5, window_bounds = array<i64: 3, 512>}]} {
    %c0 = arith.constant 0 : index
    %c0_0 = arith.constant 0 : index
    %0 = vector.load %arg2[%c0, %c0_0] : memref<3x108xbf16, #tpu.memory_space<vmem>>, vector<3x108xbf16>
    %c0_1 = arith.constant 0 : index
    %c0_2 = arith.constant 0 : index
    %1 = vector.load %arg1[%c0_1, %c0_2] : memref<108x512xbf16, #tpu.memory_space<vmem>>, vector<108x512xbf16>
    %cst = arith.constant dense<0.000000e+00> : vector<3x512xf32>
    %2 = tpu.matmul %0, %1, %cst {dimension_numbers = #tpu.dot_dimension_numbers<[1], [0], [0], [1], [0, 0, 1, 1], [], []>} : vector<3x108xbf16>, vector<108x512xbf16>, vector<3x512xf32> -> vector<3x512xf32>
    %c0_3 = arith.constant 0 : index
    %c0_4 = arith.constant 0 : index
    %3 = vector.load %arg3[%c0_3, %c0_4] : memref<3x1xf32, #tpu.memory_space<vmem>>, vector<3x1xf32>
    %4 = vector.broadcast %3 : vector<3x1xf32> to vector<3x512xf32>
    %5 = arith.addf %2, %4 : vector<3x512xf32>
    %cst_5 = arith.constant dense<0.000000e+00> : vector<3xf32>
    %6 = vector.multi_reduction <add>, %5, %cst_5 [1] : vector<3x512xf32> to vector<3xf32>
    %7 = vector.shape_cast %6 : vector<3xf32> to vector<3x1xf32>
    %cst_6 = arith.constant 5.120000e+02 : f32
    %8 = vector.broadcast %cst_6 : f32 to vector<3x1xf32>
    %9 = arith.divf %7, %8 : vector<3x1xf32>
    %10 = vector.broadcast %9 : vector<3x1xf32> to vector<3x512xf32>
    %11 = arith.subf %5, %10 : vector<3x512xf32>
    %12 = arith.mulf %11, %11 : vector<3x512xf32>
    %cst_7 = arith.constant dense<0.000000e+00> : vector<3xf32>
    %13 = vector.multi_reduction <add>, %12, %cst_7 [1] : vector<3x512xf32> to vector<3xf32>
    %14 = vector.shape_cast %13 : vector<3xf32> to vector<3x1xf32>
    %cst_8 = arith.constant 5.120000e+02 : f32
    %15 = vector.broadcast %cst_8 : f32 to vector<3x1xf32>
    %16 = arith.divf %14, %15 : vector<3x1xf32>
    %c0_9 = arith.constant 0 : index
    %c0_10 = arith.constant 0 : index
    %17 = vector.load %arg4[%c0_9, %c0_10] : memref<3x1xf32, #tpu.memory_space<vmem>>, vector<3x1xf32>
    %cst_11 = arith.constant 9.99999974E-6 : f32
    %18 = vector.broadcast %cst_11 : f32 to vector<3x1xf32>
    %19 = arith.addf %16, %18 : vector<3x1xf32>
    %20 = math.rsqrt %19 : vector<3x1xf32>
    %21 = arith.mulf %17, %20 : vector<3x1xf32>
    %22 = vector.broadcast %9 : vector<3x1xf32> to vector<3x512xf32>
    %23 = arith.subf %5, %22 : vector<3x512xf32>
    %24 = vector.broadcast %21 : vector<3x1xf32> to vector<3x512xf32>
    %25 = arith.mulf %23, %24 : vector<3x512xf32>
    %c0_12 = arith.constant 0 : index
    %c0_13 = arith.constant 0 : index
    %26 = vector.load %arg5[%c0_12, %c0_13] : memref<3x1xf32, #tpu.memory_space<vmem>>, vector<3x1xf32>
    %27 = vector.broadcast %26 : vector<3x1xf32> to vector<3x512xf32>
    %28 = arith.addf %25, %27 : vector<3x512xf32>
    %cst_14 = arith.constant 0.000000e+00 : f32
    %29 = vector.broadcast %cst_14 : f32 to vector<3x512xf32>
    %30 = arith.maximumf %28, %29 : vector<3x512xf32>
    %c0_15 = arith.constant 0 : index
    %c0_16 = arith.constant 0 : index
    %31 = vector.load %arg6[%c0_15, %c0_16] : memref<3x512xf32, #tpu.memory_space<vmem>>, vector<3x512xf32>
    tpu.vector_store %arg6[%c0_15, %c0_16], %30 {strides = array<i32>} : memref<3x512xf32, #tpu.memory_space<vmem>>, vector<3x512xf32>,
    return
  }
  func.func @transform_0(%arg0: i32) -> (i32, i32) {
    %c0_i32 = arith.constant 0 : i32
    %c0_i32_0 = arith.constant 0 : i32
    %c0_i32_1 = arith.constant 0 : i32
    return %c0_i32, %c0_i32_0 : i32, i32
  }
  func.func @transform_1(%arg0: i32) -> (i32, i32) {
    %c0_i32 = arith.constant 0 : i32
    %c0_i32_0 = arith.constant 0 : i32
    %c0_i32_1 = arith.constant 0 : i32
    return %c0_i32, %c0_i32_0 : i32, i32
  }
  func.func @transform_2(%arg0: i32) -> (i32, i32) {
    %c0_i32 = arith.constant 0 : i32
    %c0_i32_0 = arith.constant 0 : i32
    %c0_i32_1 = arith.constant 0 : i32
    return %c0_i32, %c0_i32_0 : i32, i32
  }
  func.func @transform_3(%arg0: i32) -> (i32, i32) {
    %c0_i32 = arith.constant 0 : i32
    %c0_i32_0 = arith.constant 0 : i32
    %c0_i32_1 = arith.constant 0 : i32
    return %c0_i32, %c0_i32_0 : i32, i32
  }
  func.func @transform_4(%arg0: i32) -> (i32, i32) {
    %c0_i32 = arith.constant 0 : i32
    %c0_i32_0 = arith.constant 0 : i32
    %c0_i32_1 = arith.constant 0 : i32
    return %c0_i32, %c0_i32_0 : i32, i32
  }
  func.func @transform_5(%arg0: i32) -> (i32, i32) {
    %c0_i32 = arith.constant 0 : i32
    %c0_i32_0 = arith.constant 0 : i32
    %c0_i32_1 = arith.constant 0 : i32
    return %c0_i32, %c0_i32_0 : i32, i32
  }
}

module attributes {stable_mosaic.version = 11 : i64} {
  func.func @_mlp_head_kernel(%arg0: i32, %arg1: memref<2x96xf32, #tpu.memory_space<vmem>>, %arg2: memref<96x64xbf16, #tpu.memory_space<vmem>>, %arg3: memref<1x64xf32, #tpu.memory_space<vmem>>, %arg4: memref<1x64xf32, #tpu.memory_space<vmem>>, %arg5: memref<1x64xf32, #tpu.memory_space<vmem>>, %arg6: memref<64x32xbf16, #tpu.memory_space<vmem>>, %arg7: memref<1x32xf32, #tpu.memory_space<vmem>>, %arg8: memref<1x32xf32, #tpu.memory_space<vmem>>, %arg9: memref<1x32xf32, #tpu.memory_space<vmem>>, %arg10: memref<32x16xbf16, #tpu.memory_space<vmem>>, %arg11: memref<1x16xf32, #tpu.memory_space<vmem>>, %arg12: memref<2x16xf32, #tpu.memory_space<vmem>>) attributes {dimension_semantics = [#tpu.dimension_semantics<arbitrary>], iteration_bounds = array<i64: 1>, scalar_prefetch = 0 : i64, scratch_operands = 0 : i64, tpu.core_type = #tpu.core_type<tc>, window_params = [{pipeline_mode = #tpu.pipeline_mode<synchronous>, transform_indices = @transform_0, window_bounds = array<i64: 2, 96>}, {pipeline_mode = #tpu.pipeline_mode<synchronous>, transform_indices = @transform_1, window_bounds = array<i64: 96, 64>}, {pipeline_mode = #tpu.pipeline_mode<synchronous>, transform_indices = @transform_2, window_bounds = array<i64: 1, 64>}, {pipeline_mode = #tpu.pipeline_mode<synchronous>, transform_indices = @transform_3, window_bounds = array<i64: 1, 64>}, {pipeline_mode = #tpu.pipeline_mode<synchronous>, transform_indices = @transform_4, window_bounds = array<i64: 1, 64>}, {pipeline_mode = #tpu.pipeline_mode<synchronous>, transform_indices = @transform_5, window_bounds = array<i64: 64, 32>}, {pipeline_mode = #tpu.pipeline_mode<synchronous>, transform_indices = @transform_6, window_bounds = array<i64: 1, 32>}, {pipeline_mode = #tpu.pipeline_mode<synchronous>, transform_indices = @transform_7, window_bounds = array<i64: 1, 32>}, {pipeline_mode = #tpu.pipeline_mode<synchronous>, transform_indices = @transform_8, window_bounds = array<i64: 1, 32>}, {pipeline_mode = #tpu.pipeline_mode<synchronous>, transform_indices = @transform_9, window_bounds = array<i64: 32, 16>}, {pipeline_mode = #tpu.pipeline_mode<synchronous>, transform_indices = @transform_10, window_bounds = array<i64: 1, 16>}, {pipeline_mode = #tpu.pipeline_mode<synchronous>, transform_indices = @transform_11, window_bounds = array<i64: 2, 16>}]} {
    %c0 = arith.constant 0 : index
    %c0_0 = arith.constant 0 : index
    %0 = vector.load %arg1[%c0, %c0_0] : memref<2x96xf32, #tpu.memory_space<vmem>>, vector<2x96xf32>
    %1 = arith.truncf %0 : vector<2x96xf32> to vector<2x96xbf16>
    %c0_1 = arith.constant 0 : index
    %c0_2 = arith.constant 0 : index
    %2 = vector.load %arg2[%c0_1, %c0_2] : memref<96x64xbf16, #tpu.memory_space<vmem>>, vector<96x64xbf16>
    %cst = arith.constant dense<0.000000e+00> : vector<2x64xf32>
    %3 = tpu.matmul %1, %2, %cst {dimension_numbers = #tpu.dot_dimension_numbers<[1], [0], [0], [1], [0, 0, 1, 1], [], []>} : vector<2x96xbf16>, vector<96x64xbf16>, vector<2x64xf32> -> vector<2x64xf32>
    %c0_3 = arith.constant 0 : index
    %c0_4 = arith.constant 0 : index
    %4 = vector.load %arg3[%c0_3, %c0_4] : memref<1x64xf32, #tpu.memory_space<vmem>>, vector<1x64xf32>
    %5 = vector.broadcast %4 : vector<1x64xf32> to vector<2x64xf32>
    %6 = arith.addf %3, %5 : vector<2x64xf32>
    %cst_5 = arith.constant dense<0.000000e+00> : vector<64xf32>
    %7 = vector.multi_reduction <add>, %6, %cst_5 [0] : vector<2x64xf32> to vector<64xf32>
    %8 = vector.shape_cast %7 : vector<64xf32> to vector<1x64xf32>
    %cst_6 = arith.constant 2.000000e+00 : f32
    %9 = vector.broadcast %cst_6 : f32 to vector<1x64xf32>
    %10 = arith.divf %8, %9 : vector<1x64xf32>
    %11 = vector.broadcast %10 : vector<1x64xf32> to vector<2x64xf32>
    %12 = arith.subf %6, %11 : vector<2x64xf32>
    %13 = arith.mulf %12, %12 : vector<2x64xf32>
    %cst_7 = arith.constant dense<0.000000e+00> : vector<64xf32>
    %14 = vector.multi_reduction <add>, %13, %cst_7 [0] : vector<2x64xf32> to vector<64xf32>
    %15 = vector.shape_cast %14 : vector<64xf32> to vector<1x64xf32>
    %cst_8 = arith.constant 2.000000e+00 : f32
    %16 = vector.broadcast %cst_8 : f32 to vector<1x64xf32>
    %17 = arith.divf %15, %16 : vector<1x64xf32>
    %18 = vector.broadcast %10 : vector<1x64xf32> to vector<2x64xf32>
    %19 = arith.subf %6, %18 : vector<2x64xf32>
    %c0_9 = arith.constant 0 : index
    %c0_10 = arith.constant 0 : index
    %20 = vector.load %arg4[%c0_9, %c0_10] : memref<1x64xf32, #tpu.memory_space<vmem>>, vector<1x64xf32>
    %cst_11 = arith.constant 9.99999974E-6 : f32
    %21 = vector.broadcast %cst_11 : f32 to vector<1x64xf32>
    %22 = arith.addf %17, %21 : vector<1x64xf32>
    %23 = math.rsqrt %22 : vector<1x64xf32>
    %24 = arith.mulf %20, %23 : vector<1x64xf32>
    %25 = vector.broadcast %24 : vector<1x64xf32> to vector<2x64xf32>
    %26 = arith.mulf %19, %25 : vector<2x64xf32>
    %c0_12 = arith.constant 0 : index
    %c0_13 = arith.constant 0 : index
    %27 = vector.load %arg5[%c0_12, %c0_13] : memref<1x64xf32, #tpu.memory_space<vmem>>, vector<1x64xf32>
    %28 = vector.broadcast %27 : vector<1x64xf32> to vector<2x64xf32>
    %29 = arith.addf %26, %28 : vector<2x64xf32>
    %cst_14 = arith.constant 0.000000e+00 : f32
    %30 = vector.broadcast %cst_14 : f32 to vector<2x64xf32>
    %31 = arith.maximumf %29, %30 : vector<2x64xf32>
    %32 = arith.truncf %31 : vector<2x64xf32> to vector<2x64xbf16>
    %c0_15 = arith.constant 0 : index
    %c0_16 = arith.constant 0 : index
    %33 = vector.load %arg6[%c0_15, %c0_16] : memref<64x32xbf16, #tpu.memory_space<vmem>>, vector<64x32xbf16>
    %cst_17 = arith.constant dense<0.000000e+00> : vector<2x32xf32>
    %34 = tpu.matmul %32, %33, %cst_17 {dimension_numbers = #tpu.dot_dimension_numbers<[1], [0], [0], [1], [0, 0, 1, 1], [], []>} : vector<2x64xbf16>, vector<64x32xbf16>, vector<2x32xf32> -> vector<2x32xf32>
    %c0_18 = arith.constant 0 : index
    %c0_19 = arith.constant 0 : index
    %35 = vector.load %arg7[%c0_18, %c0_19] : memref<1x32xf32, #tpu.memory_space<vmem>>, vector<1x32xf32>
    %36 = vector.broadcast %35 : vector<1x32xf32> to vector<2x32xf32>
    %37 = arith.addf %34, %36 : vector<2x32xf32>
    %cst_20 = arith.constant dense<0.000000e+00> : vector<32xf32>
    %38 = vector.multi_reduction <add>, %37, %cst_20 [0] : vector<2x32xf32> to vector<32xf32>
    %39 = vector.shape_cast %38 : vector<32xf32> to vector<1x32xf32>
    %cst_21 = arith.constant 2.000000e+00 : f32
    %40 = vector.broadcast %cst_21 : f32 to vector<1x32xf32>
    %41 = arith.divf %39, %40 : vector<1x32xf32>
    %42 = vector.broadcast %41 : vector<1x32xf32> to vector<2x32xf32>
    %43 = arith.subf %37, %42 : vector<2x32xf32>
    %44 = arith.mulf %43, %43 : vector<2x32xf32>
    %cst_22 = arith.constant dense<0.000000e+00> : vector<32xf32>
    %45 = vector.multi_reduction <add>, %44, %cst_22 [0] : vector<2x32xf32> to vector<32xf32>
    %46 = vector.shape_cast %45 : vector<32xf32> to vector<1x32xf32>
    %cst_23 = arith.constant 2.000000e+00 : f32
    %47 = vector.broadcast %cst_23 : f32 to vector<1x32xf32>
    %48 = arith.divf %46, %47 : vector<1x32xf32>
    %49 = vector.broadcast %41 : vector<1x32xf32> to vector<2x32xf32>
    %50 = arith.subf %37, %49 : vector<2x32xf32>
    %c0_24 = arith.constant 0 : index
    %c0_25 = arith.constant 0 : index
    %51 = vector.load %arg8[%c0_24, %c0_25] : memref<1x32xf32, #tpu.memory_space<vmem>>, vector<1x32xf32>
    %cst_26 = arith.constant 9.99999974E-6 : f32
    %52 = vector.broadcast %cst_26 : f32 to vector<1x32xf32>
    %53 = arith.addf %48, %52 : vector<1x32xf32>
    %54 = math.rsqrt %53 : vector<1x32xf32>
    %55 = arith.mulf %51, %54 : vector<1x32xf32>
    %56 = vector.broadcast %55 : vector<1x32xf32> to vector<2x32xf32>
    %57 = arith.mulf %50, %56 : vector<2x32xf32>
    %c0_27 = arith.constant 0 : index
    %c0_28 = arith.constant 0 : index
    %58 = vector.load %arg9[%c0_27, %c0_28] : memref<1x32xf32, #tpu.memory_space<vmem>>, vector<1x32xf32>
    %59 = vector.broadcast %58 : vector<1x32xf32> to vector<2x32xf32>
    %60 = arith.addf %57, %59 : vector<2x32xf32>
    %cst_29 = arith.constant 0.000000e+00 : f32
    %61 = vector.broadcast %cst_29 : f32 to vector<2x32xf32>
    %62 = arith.maximumf %60, %61 : vector<2x32xf32>
    %63 = arith.truncf %62 : vector<2x32xf32> to vector<2x32xbf16>
    %c0_30 = arith.constant 0 : index
    %c0_31 = arith.constant 0 : index
    %64 = vector.load %arg10[%c0_30, %c0_31] : memref<32x16xbf16, #tpu.memory_space<vmem>>, vector<32x16xbf16>
    %cst_32 = arith.constant dense<0.000000e+00> : vector<2x16xf32>
    %65 = tpu.matmul %63, %64, %cst_32 {dimension_numbers = #tpu.dot_dimension_numbers<[1], [0], [0], [1], [0, 0, 1, 1], [], []>} : vector<2x32xbf16>, vector<32x16xbf16>, vector<2x16xf32> -> vector<2x16xf32>
    %c0_33 = arith.constant 0 : index
    %c0_34 = arith.constant 0 : index
    %66 = vector.load %arg11[%c0_33, %c0_34] : memref<1x16xf32, #tpu.memory_space<vmem>>, vector<1x16xf32>
    %67 = vector.broadcast %66 : vector<1x16xf32> to vector<2x16xf32>
    %68 = arith.addf %65, %67 : vector<2x16xf32>
    %c0_35 = arith.constant 0 : index
    %c0_36 = arith.constant 0 : index
    %69 = vector.load %arg12[%c0_35, %c0_36] : memref<2x16xf32, #tpu.memory_space<vmem>>, vector<2x16xf32>
    tpu.vector_store %arg12[%c0_35, %c0_36], %68 {strides = array<i32>} : memref<2x16xf32, #tpu.memory_space<vmem>>, vector<2x16xf32>,
    return
  }
  func.func @transform_0(%arg0: i32) -> (i32, i32) {
    %c0_i32 = arith.constant 0 : i32
    %c0_i32_0 = arith.constant 0 : i32
    %c0_i32_1 = arith.constant 0 : i32
    return %c0_i32, %c0_i32_0 : i32, i32
  }
  func.func @transform_1(%arg0: i32) -> (i32, i32) {
    %c0_i32 = arith.constant 0 : i32
    %c0_i32_0 = arith.constant 0 : i32
    %c0_i32_1 = arith.constant 0 : i32
    return %c0_i32, %c0_i32_0 : i32, i32
  }
  func.func @transform_2(%arg0: i32) -> (i32, i32) {
    %c0_i32 = arith.constant 0 : i32
    %c0_i32_0 = arith.constant 0 : i32
    %c0_i32_1 = arith.constant 0 : i32
    return %c0_i32, %c0_i32_0 : i32, i32
  }
  func.func @transform_3(%arg0: i32) -> (i32, i32) {
    %c0_i32 = arith.constant 0 : i32
    %c0_i32_0 = arith.constant 0 : i32
    %c0_i32_1 = arith.constant 0 : i32
    return %c0_i32, %c0_i32_0 : i32, i32
  }
  func.func @transform_4(%arg0: i32) -> (i32, i32) {
    %c0_i32 = arith.constant 0 : i32
    %c0_i32_0 = arith.constant 0 : i32
    %c0_i32_1 = arith.constant 0 : i32
    return %c0_i32, %c0_i32_0 : i32, i32
  }
  func.func @transform_5(%arg0: i32) -> (i32, i32) {
    %c0_i32 = arith.constant 0 : i32
    %c0_i32_0 = arith.constant 0 : i32
    %c0_i32_1 = arith.constant 0 : i32
    return %c0_i32, %c0_i32_0 : i32, i32
  }
  func.func @transform_6(%arg0: i32) -> (i32, i32) {
    %c0_i32 = arith.constant 0 : i32
    %c0_i32_0 = arith.constant 0 : i32
    %c0_i32_1 = arith.constant 0 : i32
    return %c0_i32, %c0_i32_0 : i32, i32
  }
  func.func @transform_7(%arg0: i32) -> (i32, i32) {
    %c0_i32 = arith.constant 0 : i32
    %c0_i32_0 = arith.constant 0 : i32
    %c0_i32_1 = arith.constant 0 : i32
    return %c0_i32, %c0_i32_0 : i32, i32
  }
  func.func @transform_8(%arg0: i32) -> (i32, i32) {
    %c0_i32 = arith.constant 0 : i32
    %c0_i32_0 = arith.constant 0 : i32
    %c0_i32_1 = arith.constant 0 : i32
    return %c0_i32, %c0_i32_0 : i32, i32
  }
  func.func @transform_9(%arg0: i32) -> (i32, i32) {
    %c0_i32 = arith.constant 0 : i32
    %c0_i32_0 = arith.constant 0 : i32
    %c0_i32_1 = arith.constant 0 : i32
    return %c0_i32, %c0_i32_0 : i32, i32
  }
  func.func @transform_10(%arg0: i32) -> (i32, i32) {
    %c0_i32 = arith.constant 0 : i32
    %c0_i32_0 = arith.constant 0 : i32
    %c0_i32_1 = arith.constant 0 : i32
    return %c0_i32, %c0_i32_0 : i32, i32
  }
  func.func @transform_11(%arg0: i32) -> (i32, i32) {
    %c0_i32 = arith.constant 0 : i32
    %c0_i32_0 = arith.constant 0 : i32
    %c0_i32_1 = arith.constant 0 : i32
    return %c0_i32, %c0_i32_0 : i32, i32
  }
}

</mosaic_0001>

<llo_original>
// kernel: cnn3d_encoder_forward.3
$region0: #{cnn3d_encoder_forward.3}
  #allocation0 [shape = 'u32[]', space=smem, size = 0x4, offset = 0x4, fixed_abs, tag = 'smem constant byte address 0x4 - core index']
  #allocation1 [shape = 'u32[72,128]{1,0:T(1,128)}', space=vmem, size = 0x9000, scoped, tag = 'internal scratch']
  %s0 = inlined_call_operand.vmem [shape: bf16[54,4096], index: 0, kind: input, shape index: {}]
  %s1 = inlined_call_operand.vmem [shape: bf16[4,54], index: 1, kind: input, shape index: {}]
  %s2 = inlined_call_operand.vmem [shape: f32[4,1], index: 2, kind: input, shape index: {}]
  %s3 = inlined_call_operand.vmem [shape: f32[4,1], index: 3, kind: input, shape index: {}]
  %s4 = inlined_call_operand.vmem [shape: f32[4,1], index: 4, kind: input, shape index: {}]
  %s5 = inlined_call_operand.vmem [shape: f32[4,4096], index: 5, kind: output, shape index: {}]
  %s6 = sld [smem:[#allocation0]]
  $region30: #{cnn3d_encoder_forward.3} parent=0
    _
  %s8 = ssub.s32 1, %s6
  %s9 = scalar_select 0, %s8, %s6
  // Predicated region
  $region2: #{cnn3d_encoder_forward.3} parent=0 // pred_check
    _
  $region3: #{cnn3d_encoder_forward.3} parent=0 // pred_check_branch
    %11 = sbr.rel (0) target = $region5
  $region4: #{cnn3d_encoder_forward.3} parent=0 // pred_region
    _
  $region5: #{cnn3d_encoder_forward.3} parent=0 // pred_fallthru
    _
  // Predicated region
  $region6: #{cnn3d_encoder_forward.3} parent=0 // pred_check
    _
  $region7: #{cnn3d_encoder_forward.3} parent=0 // pred_check_branch
    %13 = sbr.rel (0) target = $region9
  $region8: #{cnn3d_encoder_forward.3} parent=0 // pred_region
    _
  $region9: #{cnn3d_encoder_forward.3} parent=0 // pred_fallthru
    _
  // Predicated region
  $region10: #{cnn3d_encoder_forward.3} parent=0 // pred_check
    _
  $region11: #{cnn3d_encoder_forward.3} parent=0 // pred_check_branch
    %15 = sbr.rel (0) target = $region13
  $region12: #{cnn3d_encoder_forward.3} parent=0 // pred_region
    _
  $region13: #{cnn3d_encoder_forward.3} parent=0 // pred_fallthru
    _
  // Predicated region
  $region14: #{cnn3d_encoder_forward.3} parent=0 // pred_check
    _
  $region15: #{cnn3d_encoder_forward.3} parent=0 // pred_check_branch
    %17 = sbr.rel (0) target = $region17
  $region16: #{cnn3d_encoder_forward.3} parent=0 // pred_region
    _
  $region17: #{cnn3d_encoder_forward.3} parent=0 // pred_fallthru
    _
  // Predicated region
  $region18: #{cnn3d_encoder_forward.3} parent=0 // pred_check
    _
  $region19: #{cnn3d_encoder_forward.3} parent=0 // pred_check_branch
    %19 = sbr.rel (0) target = $region21
  $region20: #{cnn3d_encoder_forward.3} parent=0 // pred_region
    _
  $region21: #{cnn3d_encoder_forward.3} parent=0 // pred_fallthru
    _
  %v21 = vld [vmem:[%s1] sm:$0x3]
  %v22 = vld [vmem:[%s0] sm:$0xff]
  %v23 = vld [vmem:[%s0 + $0x8] sm:$0xff]
  %v24 = vld [vmem:[%s0 + $0x10] sm:$0xff]
  %v25 = vld [vmem:[%s0 + $0x18] sm:$0xff]
  %v26 = vld [vmem:[%s0 + $0x20] sm:$0xff]
  %v27 = vld [vmem:[%s0 + $0x28] sm:$0xff]
  %v28 = vld [vmem:[%s0 + $0x30] sm:$0xff]
  %v29 = vld [vmem:[%s0 + $0x38] sm:$0xff]
  %v30 = vld [vmem:[%s0 + $0x40] sm:$0xff]
  %v31 = vld [vmem:[%s0 + $0x48] sm:$0xff]
  %v32 = vld [vmem:[%s0 + $0x50] sm:$0xff]
  %v33 = vld [vmem:[%s0 + $0x58] sm:$0xff]
  %v34 = vld [vmem:[%s0 + $0x60] sm:$0xff]
  %v35 = vld [vmem:[%s0 + $0x68] sm:$0xff]
  %v36 = vld [vmem:[%s0 + $0x70] sm:$0xff]
  %v37 = vld [vmem:[%s0 + $0x78] sm:$0xff]
  %v38 = vld [vmem:[%s0 + $0x80] sm:$0xff]
  %v39 = vld [vmem:[%s0 + $0x88] sm:$0xff]
  %v40 = vld [vmem:[%s0 + $0x90] sm:$0xff]
  %v41 = vld [vmem:[%s0 + $0x98] sm:$0xff]
  %v42 = vld [vmem:[%s0 + $0xa0] sm:$0xff]
  %v43 = vld [vmem:[%s0 + $0xa8] sm:$0xff]
  %v44 = vld [vmem:[%s0 + $0xb0] sm:$0xff]
  %v45 = vld [vmem:[%s0 + $0xb8] sm:$0xff]
  %v46 = vld [vmem:[%s0 + $0xc0] sm:$0xff]
  %v47 = vld [vmem:[%s0 + $0xc8] sm:$0xff]
  %v48 = vld [vmem:[%s0 + $0xd0] sm:$0xff]
  %v49 = vld [vmem:[%s0 + $0xd8] sm:$0xff]
  %v50 = vld [vmem:[%s0 + $0xe0] sm:$0xff]
  %v51 = vld [vmem:[%s0 + $0xe8] sm:$0xff]
  %v52 = vld [vmem:[%s0 + $0xf0] sm:$0xff]
  %v53 = vld [vmem:[%s0 + $0xf8] sm:$0xff]
  %v54 = vld [vmem:[%s0 + $0x100] sm:$0xff]
  %v55 = vld [vmem:[%s0 + $0x108] sm:$0xff]
  %v56 = vld [vmem:[%s0 + $0x110] sm:$0xff]
  %v57 = vld [vmem:[%s0 + $0x118] sm:$0xff]
  %v58 = vld [vmem:[%s0 + $0x120] sm:$0xff]
  %v59 = vld [vmem:[%s0 + $0x128] sm:$0xff]
  %v60 = vld [vmem:[%s0 + $0x130] sm:$0xff]
  %v61 = vld [vmem:[%s0 + $0x138] sm:$0xff]
  %v62 = vld [vmem:[%s0 + $0x140] sm:$0xff]
  %v63 = vld [vmem:[%s0 + $0x148] sm:$0xff]
  %v64 = vld [vmem:[%s0 + $0x150] sm:$0xff]
  %v65 = vld [vmem:[%s0 + $0x158] sm:$0xff]
  %v66 = vld [vmem:[%s0 + $0x160] sm:$0xff]
  %v67 = vld [vmem:[%s0 + $0x168] sm:$0xff]
  %v68 = vld [vmem:[%s0 + $0x170] sm:$0xff]
  %v69 = vld [vmem:[%s0 + $0x178] sm:$0xff]
  %v70 = vld [vmem:[%s0 + $0x180] sm:$0xff]
  %v71 = vld [vmem:[%s0 + $0x188] sm:$0xff]
  %v72 = vld [vmem:[%s0 + $0x190] sm:$0xff]
  %v73 = vld [vmem:[%s0 + $0x198] sm:$0xff]
  %v74 = vld [vmem:[%s0 + $0x1a0] sm:$0xff]
  %v75 = vld [vmem:[%s0 + $0x1a8] sm:$0xff]
  %v76 = vld [vmem:[%s0 + $0x1b0] sm:$0xff]
  %v77 = vld [vmem:[%s0 + $0x1b8] sm:$0xff]
  %v78 = vld [vmem:[%s0 + $0x1c0] sm:$0xff]
  %v79 = vld [vmem:[%s0 + $0x1c8] sm:$0xff]
  %v80 = vld [vmem:[%s0 + $0x1d0] sm:$0xff]
  %v81 = vld [vmem:[%s0 + $0x1d8] sm:$0xff]
  %v82 = vld [vmem:[%s0 + $0x1e0] sm:$0xff]
  %v83 = vld [vmem:[%s0 + $0x1e8] sm:$0xff]
  %v84 = vld [vmem:[%s0 + $0x1f0] sm:$0xff]
  %v85 = vld [vmem:[%s0 + $0x1f8] sm:$0xff]
  %v86 = vld [vmem:[%s0 + $0x200] sm:$0xff]
  %v87 = vld [vmem:[%s0 + $0x208] sm:$0xff]
  %v88 = vld [vmem:[%s0 + $0x210] sm:$0xff]
  %v89 = vld [vmem:[%s0 + $0x218] sm:$0xff]
  %v90 = vld [vmem:[%s0 + $0x220] sm:$0xff]
  %v91 = vld [vmem:[%s0 + $0x228] sm:$0xff]
  %v92 = vld [vmem:[%s0 + $0x230] sm:$0xff]
  %v93 = vld [vmem:[%s0 + $0x238] sm:$0xff]
  %v94 = vld [vmem:[%s0 + $0x240] sm:$0xff]
  %v95 = vld [vmem:[%s0 + $0x248] sm:$0xff]
  %v96 = vld [vmem:[%s0 + $0x250] sm:$0xff]
  %v97 = vld [vmem:[%s0 + $0x258] sm:$0xff]
  %v98 = vld [vmem:[%s0 + $0x260] sm:$0xff]
  %v99 = vld [vmem:[%s0 + $0x268] sm:$0xff]
  %v100 = vld [vmem:[%s0 + $0x270] sm:$0xff]
  %v101 = vld [vmem:[%s0 + $0x278] sm:$0xff]
  %v102 = vld [vmem:[%s0 + $0x280] sm:$0xff]
  %v103 = vld [vmem:[%s0 + $0x288] sm:$0xff]
  %v104 = vld [vmem:[%s0 + $0x290] sm:$0xff]
  %v105 = vld [vmem:[%s0 + $0x298] sm:$0xff]
  %v106 = vld [vmem:[%s0 + $0x2a0] sm:$0xff]
  %v107 = vld [vmem:[%s0 + $0x2a8] sm:$0xff]
  %v108 = vld [vmem:[%s0 + $0x2b0] sm:$0xff]
  %v109 = vld [vmem:[%s0 + $0x2b8] sm:$0xff]
  %v110 = vld [vmem:[%s0 + $0x2c0] sm:$0xff]
  %v111 = vld [vmem:[%s0 + $0x2c8] sm:$0xff]
  %v112 = vld [vmem:[%s0 + $0x2d0] sm:$0xff]
  %v113 = vld [vmem:[%s0 + $0x2d8] sm:$0xff]
  %v114 = vld [vmem:[%s0 + $0x2e0] sm:$0xff]
  %v115 = vld [vmem:[%s0 + $0x2e8] sm:$0xff]
  %v116 = vld [vmem:[%s0 + $0x2f0] sm:$0xff]
  %v117 = vld [vmem:[%s0 + $0x2f8] sm:$0xff]
  %v118 = vld [vmem:[%s0 + $0x300] sm:$0x77]
  %v119 = vld [vmem:[%s0 + $0x308] sm:$0x77]
  %v120 = vld [vmem:[%s0 + $0x310] sm:$0x77]
  %v121 = vld [vmem:[%s0 + $0x318] sm:$0x77]
  %v122 = vld [vmem:[%s0 + $0x320] sm:$0x77]
  %v123 = vld [vmem:[%s0 + $0x328] sm:$0x77]
  %v124 = vld [vmem:[%s0 + $0x330] sm:$0x77]
  %v125 = vld [vmem:[%s0 + $0x338] sm:$0x77]
  %v126 = vld [vmem:[%s0 + $0x340] sm:$0x77]
  %v127 = vld [vmem:[%s0 + $0x348] sm:$0x77]
  %v128 = vld [vmem:[%s0 + $0x350] sm:$0x77]
  %v129 = vld [vmem:[%s0 + $0x358] sm:$0x77]
  %v130 = vld [vmem:[%s0 + $0x360] sm:$0x77]
  %v131 = vld [vmem:[%s0 + $0x368] sm:$0x77]
  %v132 = vld [vmem:[%s0 + $0x370] sm:$0x77]
  %v133 = vld [vmem:[%s0 + $0x378] sm:$0x77]
  %v134 = vld [vmem:[%s2] sm:$0xf]
  %136 = vset.pattern.permute.xlu0 0
  %137 = vperm.xlu0 %136, %v134
  %v138 = vpop.permute.xlu0 %137
  %v252 = vunpack.c.l.b16 %v22
  %v253 = vunpack.c.h.b16 %v22
  %v254 = vunpack.c.l.b16 %v23
  %v255 = vunpack.c.h.b16 %v23
  %v256 = vunpack.c.l.b16 %v24
  %v257 = vunpack.c.h.b16 %v24
  %v258 = vunpack.c.l.b16 %v25
  %v259 = vunpack.c.h.b16 %v25
  %v260 = vunpack.c.l.b16 %v26
  %v261 = vunpack.c.h.b16 %v26
  %v262 = vunpack.c.l.b16 %v27
  %v263 = vunpack.c.h.b16 %v27
  %v264 = vunpack.c.l.b16 %v28
  %v265 = vunpack.c.h.b16 %v28
  %v266 = vunpack.c.l.b16 %v29
  %v267 = vunpack.c.h.b16 %v29
  %v268 = vunpack.c.l.b16 %v30
  %v269 = vunpack.c.h.b16 %v30
  %v270 = vunpack.c.l.b16 %v31
  %v271 = vunpack.c.h.b16 %v31
  %v272 = vunpack.c.l.b16 %v32
  %v273 = vunpack.c.h.b16 %v32
  %v274 = vunpack.c.l.b16 %v33
  %v275 = vunpack.c.h.b16 %v33
  %v276 = vunpack.c.l.b16 %v34
  %v277 = vunpack.c.h.b16 %v34
  %v278 = vunpack.c.l.b16 %v35
  %v279 = vunpack.c.h.b16 %v35
  %v280 = vunpack.c.l.b16 %v36
  %v281 = vunpack.c.h.b16 %v36
  %v282 = vunpack.c.l.b16 %v37
  %v283 = vunpack.c.h.b16 %v37
  %v284 = vunpack.c.l.b16 %v38
  %v285 = vunpack.c.h.b16 %v38
  %v286 = vunpack.c.l.b16 %v39
  %v287 = vunpack.c.h.b16 %v39
  %v288 = vunpack.c.l.b16 %v40
  %v289 = vunpack.c.h.b16 %v40
  %v290 = vunpack.c.l.b16 %v41
  %v291 = vunpack.c.h.b16 %v41
  %v292 = vunpack.c.l.b16 %v42
  %v293 = vunpack.c.h.b16 %v42
  %v294 = vunpack.c.l.b16 %v43
  %v295 = vunpack.c.h.b16 %v43
  %v296 = vunpack.c.l.b16 %v44
  %v297 = vunpack.c.h.b16 %v44
  %v298 = vunpack.c.l.b16 %v45
  %v299 = vunpack.c.h.b16 %v45
  %v300 = vunpack.c.l.b16 %v46
  %v301 = vunpack.c.h.b16 %v46
  %v302 = vunpack.c.l.b16 %v47
  %v303 = vunpack.c.h.b16 %v47
  %v304 = vunpack.c.l.b16 %v48
  %v305 = vunpack.c.h.b16 %v48
  %v306 = vunpack.c.l.b16 %v49
  %v307 = vunpack.c.h.b16 %v49
  %v308 = vunpack.c.l.b16 %v50
  %v309 = vunpack.c.h.b16 %v50
  %v310 = vunpack.c.l.b16 %v51
  %v311 = vunpack.c.h.b16 %v51
  %v312 = vunpack.c.l.b16 %v52
  %v313 = vunpack.c.h.b16 %v52
  %v314 = vunpack.c.l.b16 %v53
  %v315 = vunpack.c.h.b16 %v53
  %v316 = vunpack.c.l.b16 %v54
  %v317 = vunpack.c.h.b16 %v54
  %v318 = vunpack.c.l.b16 %v55
  %v319 = vunpack.c.h.b16 %v55
  %v320 = vunpack.c.l.b16 %v56
  %v321 = vunpack.c.h.b16 %v56
  %v322 = vunpack.c.l.b16 %v57
  %v323 = vunpack.c.h.b16 %v57
  %v324 = vunpack.c.l.b16 %v58
  %v325 = vunpack.c.h.b16 %v58
  %v326 = vunpack.c.l.b16 %v59
  %v327 = vunpack.c.h.b16 %v59
  %v328 = vunpack.c.l.b16 %v60
  %v329 = vunpack.c.h.b16 %v60
  %v330 = vunpack.c.l.b16 %v61
  %v331 = vunpack.c.h.b16 %v61
  %v332 = vunpack.c.l.b16 %v62
  %v333 = vunpack.c.h.b16 %v62
  %v334 = vunpack.c.l.b16 %v63
  %v335 = vunpack.c.h.b16 %v63
  %v336 = vunpack.c.l.b16 %v64
  %v337 = vunpack.c.h.b16 %v64
  %v338 = vunpack.c.l.b16 %v65
  %v339 = vunpack.c.h.b16 %v65
  %v340 = vunpack.c.l.b16 %v66
  %v341 = vunpack.c.h.b16 %v66
  %v342 = vunpack.c.l.b16 %v67
  %v343 = vunpack.c.h.b16 %v67
  %v344 = vunpack.c.l.b16 %v68
  %v345 = vunpack.c.h.b16 %v68
  %v346 = vunpack.c.l.b16 %v69
  %v347 = vunpack.c.h.b16 %v69
  %v348 = vunpack.c.l.b16 %v70
  %v349 = vunpack.c.h.b16 %v70
  %v350 = vunpack.c.l.b16 %v71
  %v351 = vunpack.c.h.b16 %v71
  %v352 = vunpack.c.l.b16 %v72
  %v353 = vunpack.c.h.b16 %v72
  %v354 = vunpack.c.l.b16 %v73
  %v355 = vunpack.c.h.b16 %v73
  %v356 = vunpack.c.l.b16 %v74
  %v357 = vunpack.c.h.b16 %v74
  %v358 = vunpack.c.l.b16 %v75
  %v359 = vunpack.c.h.b16 %v75
  %v360 = vunpack.c.l.b16 %v76
  %v361 = vunpack.c.h.b16 %v76
  %v362 = vunpack.c.l.b16 %v77
  %v363 = vunpack.c.h.b16 %v77
  %v364 = vunpack.c.l.b16 %v78
  %v365 = vunpack.c.h.b16 %v78
  %v366 = vunpack.c.l.b16 %v79
  %v367 = vunpack.c.h.b16 %v79
  %v368 = vunpack.c.l.b16 %v80
  %v369 = vunpack.c.h.b16 %v80
  %v370 = vunpack.c.l.b16 %v81
  %v371 = vunpack.c.h.b16 %v81
  %v372 = vunpack.c.l.b16 %v82
  %v373 = vunpack.c.h.b16 %v82
  %v374 = vunpack.c.l.b16 %v83
  %v375 = vunpack.c.h.b16 %v83
  %v376 = vunpack.c.l.b16 %v84
  %v377 = vunpack.c.h.b16 %v84
  %v378 = vunpack.c.l.b16 %v85
  %v379 = vunpack.c.h.b16 %v85
  %v380 = vunpack.c.l.b16 %v86
  %v381 = vunpack.c.h.b16 %v86
  %v382 = vunpack.c.l.b16 %v87
  %v383 = vunpack.c.h.b16 %v87
  %v384 = vunpack.c.l.b16 %v88
  %v385 = vunpack.c.h.b16 %v88
  %v386 = vunpack.c.l.b16 %v89
  %v387 = vunpack.c.h.b16 %v89
  %v388 = vunpack.c.l.b16 %v90
  %v389 = vunpack.c.h.b16 %v90
  %v390 = vunpack.c.l.b16 %v91
  %v391 = vunpack.c.h.b16 %v91
  %v392 = vunpack.c.l.b16 %v92
  %v393 = vunpack.c.h.b16 %v92
  %v394 = vunpack.c.l.b16 %v93
  %v395 = vunpack.c.h.b16 %v93
  %v396 = vunpack.c.l.b16 %v94
  %v397 = vunpack.c.h.b16 %v94
  %v398 = vunpack.c.l.b16 %v95
  %v399 = vunpack.c.h.b16 %v95
  %v400 = vunpack.c.l.b16 %v96
  %v401 = vunpack.c.h.b16 %v96
  %v402 = vunpack.c.l.b16 %v97
  %v403 = vunpack.c.h.b16 %v97
  %v404 = vunpack.c.l.b16 %v98
  %v405 = vunpack.c.h.b16 %v98
  %v406 = vunpack.c.l.b16 %v99
  %v407 = vunpack.c.h.b16 %v99
  %v408 = vunpack.c.l.b16 %v100
  %v409 = vunpack.c.h.b16 %v100
  %v410 = vunpack.c.l.b16 %v101
  %v411 = vunpack.c.h.b16 %v101
  %v412 = vunpack.c.l.b16 %v102
  %v413 = vunpack.c.h.b16 %v102
  %v414 = vunpack.c.l.b16 %v103
  %v415 = vunpack.c.h.b16 %v103
  %v416 = vunpack.c.l.b16 %v104
  %v417 = vunpack.c.h.b16 %v104
  %v418 = vunpack.c.l.b16 %v105
  %v419 = vunpack.c.h.b16 %v105
  %v420 = vunpack.c.l.b16 %v106
  %v421 = vunpack.c.h.b16 %v106
  %v422 = vunpack.c.l.b16 %v107
  %v423 = vunpack.c.h.b16 %v107
  %v424 = vunpack.c.l.b16 %v108
  %v425 = vunpack.c.h.b16 %v108
  %v426 = vunpack.c.l.b16 %v109
  %v427 = vunpack.c.h.b16 %v109
  %v428 = vunpack.c.l.b16 %v110
  %v429 = vunpack.c.h.b16 %v110
  %v430 = vunpack.c.l.b16 %v111
  %v431 = vunpack.c.h.b16 %v111
  %v432 = vunpack.c.l.b16 %v112
  %v433 = vunpack.c.h.b16 %v112
  %v434 = vunpack.c.l.b16 %v113
  %v435 = vunpack.c.h.b16 %v113
  %v436 = vunpack.c.l.b16 %v114
  %v437 = vunpack.c.h.b16 %v114
  %v438 = vunpack.c.l.b16 %v115
  %v439 = vunpack.c.h.b16 %v115
  %v440 = vunpack.c.l.b16 %v116
  %v441 = vunpack.c.h.b16 %v116
  %v442 = vunpack.c.l.b16 %v117
  %v443 = vunpack.c.h.b16 %v117
  %v444 = vunpack.c.l.b16 %v118
  %v445 = vunpack.c.h.b16 %v118
  %v446 = vunpack.c.l.b16 %v119
  %v447 = vunpack.c.h.b16 %v119
  %v448 = vunpack.c.l.b16 %v120
  %v449 = vunpack.c.h.b16 %v120
  %v450 = vunpack.c.l.b16 %v121
  %v451 = vunpack.c.h.b16 %v121
  %v452 = vunpack.c.l.b16 %v122
  %v453 = vunpack.c.h.b16 %v122
  %v454 = vunpack.c.l.b16 %v123
  %v455 = vunpack.c.h.b16 %v123
  %v456 = vunpack.c.l.b16 %v124
  %v457 = vunpack.c.h.b16 %v124
  %v458 = vunpack.c.l.b16 %v125
  %v459 = vunpack.c.h.b16 %v125
  %v460 = vunpack.c.l.b16 %v126
  %v461 = vunpack.c.h.b16 %v126
  %v462 = vunpack.c.l.b16 %v127
  %v463 = vunpack.c.h.b16 %v127
  %v464 = vunpack.c.l.b16 %v128
  %v465 = vunpack.c.h.b16 %v128
  %v466 = vunpack.c.l.b16 %v129
  %v467 = vunpack.c.h.b16 %v129
  %v468 = vunpack.c.l.b16 %v130
  %v469 = vunpack.c.h.b16 %v130
  %v470 = vunpack.c.l.b16 %v131
  %v471 = vunpack.c.h.b16 %v131
  %v472 = vunpack.c.l.b16 %v132
  %v473 = vunpack.c.h.b16 %v132
  %v474 = vunpack.c.l.b16 %v133
  %v475 = vunpack.c.h.b16 %v133
  %v476 = vpack.c.b16 %v284, %v252
  %v477 = vpack.c.b16 %v285, %v253
  %v478 = vpack.c.b16 %v286, %v254
  %v479 = vpack.c.b16 %v287, %v255
  %v480 = vpack.c.b16 %v288, %v256
  %v481 = vpack.c.b16 %v289, %v257
  %v482 = vpack.c.b16 %v290, %v258
  %v483 = vpack.c.b16 %v291, %v259
  %v484 = vpack.c.b16 %v292, %v260
  %v485 = vpack.c.b16 %v293, %v261
  %v486 = vpack.c.b16 %v294, %v262
  %v487 = vpack.c.b16 %v295, %v263
  %v488 = vpack.c.b16 %v296, %v264
  %v489 = vpack.c.b16 %v297, %v265
  %v490 = vpack.c.b16 %v298, %v266
  %v491 = vpack.c.b16 %v299, %v267
  %v492 = vpack.c.b16 %v300, %v268
  %v493 = vpack.c.b16 %v301, %v269
  %v494 = vpack.c.b16 %v302, %v270
  %v495 = vpack.c.b16 %v303, %v271
  %v496 = vpack.c.b16 %v304, %v272
  %v497 = vpack.c.b16 %v305, %v273
  %v498 = vpack.c.b16 %v306, %v274
  %v499 = vpack.c.b16 %v307, %v275
  %v500 = vpack.c.b16 %v308, %v276
  %v501 = vpack.c.b16 %v309, %v277
  %v502 = vpack.c.b16 %v310, %v278
  %v503 = vpack.c.b16 %v311, %v279
  %v504 = vpack.c.b16 %v312, %v280
  %v505 = vpack.c.b16 %v313, %v281
  %v506 = vpack.c.b16 %v314, %v282
  %v507 = vpack.c.b16 %v315, %v283
  %v508 = vpack.c.b16 %v348, %v316
  %v509 = vpack.c.b16 %v349, %v317
  %v510 = vpack.c.b16 %v350, %v318
  %v511 = vpack.c.b16 %v351, %v319
  %v512 = vpack.c.b16 %v352, %v320
  %v513 = vpack.c.b16 %v353, %v321
  %v514 = vpack.c.b16 %v354, %v322
  %v515 = vpack.c.b16 %v355, %v323
  %v516 = vpack.c.b16 %v356, %v324
  %v517 = vpack.c.b16 %v357, %v325
  %v518 = vpack.c.b16 %v358, %v326
  %v519 = vpack.c.b16 %v359, %v327
  %v520 = vpack.c.b16 %v360, %v328
  %v521 = vpack.c.b16 %v361, %v329
  %v522 = vpack.c.b16 %v362, %v330
  %v523 = vpack.c.b16 %v363, %v331
  %v524 = vpack.c.b16 %v364, %v332
  %v525 = vpack.c.b16 %v365, %v333
  %v526 = vpack.c.b16 %v366, %v334
  %v527 = vpack.c.b16 %v367, %v335
  %v528 = vpack.c.b16 %v368, %v336
  %v529 = vpack.c.b16 %v369, %v337
  %v530 = vpack.c.b16 %v370, %v338
  %v531 = vpack.c.b16 %v371, %v339
  %v532 = vpack.c.b16 %v372, %v340
  %v533 = vpack.c.b16 %v373, %v341
  %v534 = vpack.c.b16 %v374, %v342
  %v535 = vpack.c.b16 %v375, %v343
  %v536 = vpack.c.b16 %v376, %v344
  %v537 = vpack.c.b16 %v377, %v345
  %v538 = vpack.c.b16 %v378, %v346
  %v539 = vpack.c.b16 %v379, %v347
  %v540 = vpack.c.b16 %v412, %v380
  %v541 = vpack.c.b16 %v413, %v381
  %v542 = vpack.c.b16 %v414, %v382
  %v543 = vpack.c.b16 %v415, %v383
  %v544 = vpack.c.b16 %v416, %v384
  %v545 = vpack.c.b16 %v417, %v385
  %v546 = vpack.c.b16 %v418, %v386
  %v547 = vpack.c.b16 %v419, %v387
  %v548 = vpack.c.b16 %v420, %v388
  %v549 = vpack.c.b16 %v421, %v389
  %v550 = vpack.c.b16 %v422, %v390
  %v551 = vpack.c.b16 %v423, %v391
  %v552 = vpack.c.b16 %v424, %v392
  %v553 = vpack.c.b16 %v425, %v393
  %v554 = vpack.c.b16 %v426, %v394
  %v555 = vpack.c.b16 %v427, %v395
  %v556 = vpack.c.b16 %v428, %v396
  %v557 = vpack.c.b16 %v429, %v397
  %v558 = vpack.c.b16 %v430, %v398
  %v559 = vpack.c.b16 %v431, %v399
  %v560 = vpack.c.b16 %v432, %v400
  %v561 = vpack.c.b16 %v433, %v401
  %v562 = vpack.c.b16 %v434, %v402
  %v563 = vpack.c.b16 %v435, %v403
  %v564 = vpack.c.b16 %v436, %v404
  %v565 = vpack.c.b16 %v437, %v405
  %v566 = vpack.c.b16 %v438, %v406
  %v567 = vpack.c.b16 %v439, %v407
  %v568 = vpack.c.b16 %v440, %v408
  %v569 = vpack.c.b16 %v441, %v409
  %v570 = vpack.c.b16 %v442, %v410
  %v571 = vpack.c.b16 %v443, %v411
  %v572 = vpack.c.b16 %v444, %v444
  %v573 = vpack.c.b16 %v445, %v445
  %v574 = vpack.c.b16 %v446, %v446
  %v575 = vpack.c.b16 %v447, %v447
  %v576 = vpack.c.b16 %v448, %v448
  %v577 = vpack.c.b16 %v449, %v449
  %v578 = vpack.c.b16 %v450, %v450
  %v579 = vpack.c.b16 %v451, %v451
  %v580 = vpack.c.b16 %v452, %v452
  %v581 = vpack.c.b16 %v453, %v453
  %v582 = vpack.c.b16 %v454, %v454
  %v583 = vpack.c.b16 %v455, %v455
  %v584 = vpack.c.b16 %v456, %v456
  %v585 = vpack.c.b16 %v457, %v457
  %v586 = vpack.c.b16 %v458, %v458
  %v587 = vpack.c.b16 %v459, %v459
  %v588 = vpack.c.b16 %v460, %v460
  %v589 = vpack.c.b16 %v461, %v461
  %v590 = vpack.c.b16 %v462, %v462
  %v591 = vpack.c.b16 %v463, %v463
  %v592 = vpack.c.b16 %v464, %v464
  %v593 = vpack.c.b16 %v465, %v465
  %v594 = vpack.c.b16 %v466, %v466
  %v595 = vpack.c.b16 %v467, %v467
  %v596 = vpack.c.b16 %v468, %v468
  %v597 = vpack.c.b16 %v469, %v469
  %v598 = vpack.c.b16 %v470, %v470
  %v599 = vpack.c.b16 %v471, %v471
  %v600 = vpack.c.b16 %v472, %v472
  %v601 = vpack.c.b16 %v473, %v473
  %v602 = vpack.c.b16 %v474, %v474
  %v603 = vpack.c.b16 %v475, %v475
  %vm700 = vcmask 441344
  %v702 = vsel %vm700, %v21, 0
  %vm704 = vcmask 1042432
  %v706 = vsel %vm704, %v572, 0
  %v709 = vsel %vm704, %v573, 0
  %v712 = vsel %vm704, %v574, 0
  %v715 = vsel %vm704, %v575, 0
  %v718 = vsel %vm704, %v576, 0
  %v721 = vsel %vm704, %v577, 0
  %v724 = vsel %vm704, %v578, 0
  %v727 = vsel %vm704, %v579, 0
  %v730 = vsel %vm704, %v580, 0
  %v733 = vsel %vm704, %v581, 0
  %v736 = vsel %vm704, %v582, 0
  %v739 = vsel %vm704, %v583, 0
  %v742 = vsel %vm704, %v584, 0
  %v745 = vsel %vm704, %v585, 0
  %v748 = vsel %vm704, %v586, 0
  %v751 = vsel %vm704, %v587, 0
  %v754 = vsel %vm704, %v588, 0
  %v757 = vsel %vm704, %v589, 0
  %v760 = vsel %vm704, %v590, 0
  %v763 = vsel %vm704, %v591, 0
  %v766 = vsel %vm704, %v592, 0
  %v769 = vsel %vm704, %v593, 0
  %v772 = vsel %vm704, %v594, 0
  %v775 = vsel %vm704, %v595, 0
  %v778 = vsel %vm704, %v596, 0
  %v781 = vsel %vm704, %v597, 0
  %v784 = vsel %vm704, %v598, 0
  %v787 = vsel %vm704, %v599, 0
  %v790 = vsel %vm704, %v600, 0
  %v793 = vsel %vm704, %v601, 0
  %v796 = vsel %vm704, %v602, 0
  %v799 = vsel %vm704, %v603, 0
  %801 = vmatpush.bf16.msra.mxu0 0
  %802 = vmatpush.bf16.msra.mxu0 0
  %803 = vmatpush.bf16.msra.mxu0 0
  %804 = vmatpush.bf16.msra.mxu0 0
  %805 = vmatpush.bf16.msra.mxu0 %v706
  %806 = vmatpush.bf16.msra.mxu0 %v540
  %807 = vmatpush.bf16.msra.mxu0 %v508
  %808 = vmatpush.bf16.msra.mxu0 %v476
  %809 = vmatmul.bf16.gmra.mxu0 %v702
  %v810 = vpop.f32.mrf.mxu0
  %v811 = vadd.f32 %v138, %v810
  %v812 = vpop.f32.mrf.mxu0
  %813 = vdwg.mxu0
  %814 = vmatpush.bf16.msra.mxu0 0
  %815 = vmatpush.bf16.msra.mxu0 0
  %816 = vmatpush.bf16.msra.mxu0 0
  %817 = vmatpush.bf16.msra.mxu0 0
  %818 = vmatpush.bf16.msra.mxu0 %v709
  %819 = vmatpush.bf16.msra.mxu0 %v541
  %820 = vmatpush.bf16.msra.mxu0 %v509
  %821 = vmatpush.bf16.msra.mxu0 %v477
  %822 = vmatmul.bf16.gmra.mxu0 %v702
  %v823 = vpop.f32.mrf.mxu0
  %v824 = vadd.f32 %v138, %v823
  %v825 = vpop.f32.mrf.mxu0
  %826 = vdwg.mxu0
  %827 = vmatpush.bf16.msra.mxu0 0
  %828 = vmatpush.bf16.msra.mxu0 0
  %829 = vmatpush.bf16.msra.mxu0 0
  %830 = vmatpush.bf16.msra.mxu0 0
  %831 = vmatpush.bf16.msra.mxu0 %v712
  %832 = vmatpush.bf16.msra.mxu0 %v542
  %833 = vmatpush.bf16.msra.mxu0 %v510
  %834 = vmatpush.bf16.msra.mxu0 %v478
  %835 = vmatmul.bf16.gmra.mxu0 %v702
  %v836 = vpop.f32.mrf.mxu0
  %v837 = vadd.f32 %v138, %v836
  %v838 = vpop.f32.mrf.mxu0
  %839 = vdwg.mxu0
  %840 = vmatpush.bf16.msra.mxu0 0
  %841 = vmatpush.bf16.msra.mxu0 0
  %842 = vmatpush.bf16.msra.mxu0 0
  %843 = vmatpush.bf16.msra.mxu0 0
  %844 = vmatpush.bf16.msra.mxu0 %v715
  %845 = vmatpush.bf16.msra.mxu0 %v543
  %846 = vmatpush.bf16.msra.mxu0 %v511
  %847 = vmatpush.bf16.msra.mxu0 %v479
  %848 = vmatmul.bf16.gmra.mxu0 %v702
  %v849 = vpop.f32.mrf.mxu0
  %v850 = vadd.f32 %v138, %v849
  %v851 = vpop.f32.mrf.mxu0
  %852 = vdwg.mxu0
  %853 = vmatpush.bf16.msra.mxu0 0
  %854 = vmatpush.bf16.msra.mxu0 0
  %855 = vmatpush.bf16.msra.mxu0 0
  %856 = vmatpush.bf16.msra.mxu0 0
  %857 = vmatpush.bf16.msra.mxu0 %v718
  %858 = vmatpush.bf16.msra.mxu0 %v544
  %859 = vmatpush.bf16.msra.mxu0 %v512
  %860 = vmatpush.bf16.msra.mxu0 %v480
  %861 = vmatmul.bf16.gmra.mxu0 %v702
  %v862 = vpop.f32.mrf.mxu0
  %v863 = vadd.f32 %v138, %v862
  %v864 = vpop.f32.mrf.mxu0
  %865 = vdwg.mxu0
  %866 = vmatpush.bf16.msra.mxu0 0
  %867 = vmatpush.bf16.msra.mxu0 0
  %868 = vmatpush.bf16.msra.mxu0 0
  %869 = vmatpush.bf16.msra.mxu0 0
  %870 = vmatpush.bf16.msra.mxu0 %v721
  %871 = vmatpush.bf16.msra.mxu0 %v545
  %872 = vmatpush.bf16.msra.mxu0 %v513
  %873 = vmatpush.bf16.msra.mxu0 %v481
  %874 = vmatmul.bf16.gmra.mxu0 %v702
  %v875 = vpop.f32.mrf.mxu0
  %v876 = vadd.f32 %v138, %v875
  %v877 = vpop.f32.mrf.mxu0
  %878 = vdwg.mxu0
  %879 = vmatpush.bf16.msra.mxu0 0
  %880 = vmatpush.bf16.msra.mxu0 0
  %881 = vmatpush.bf16.msra.mxu0 0
  %882 = vmatpush.bf16.msra.mxu0 0
  %883 = vmatpush.bf16.msra.mxu0 %v724
  %884 = vmatpush.bf16.msra.mxu0 %v546
  %885 = vmatpush.bf16.msra.mxu0 %v514
  %886 = vmatpush.bf16.msra.mxu0 %v482
  %887 = vmatmul.bf16.gmra.mxu0 %v702
  %v888 = vpop.f32.mrf.mxu0
  %v889 = vadd.f32 %v138, %v888
  %v890 = vpop.f32.mrf.mxu0
  %891 = vdwg.mxu0
  %892 = vmatpush.bf16.msra.mxu0 0
  %893 = vmatpush.bf16.msra.mxu0 0
  %894 = vmatpush.bf16.msra.mxu0 0
  %895 = vmatpush.bf16.msra.mxu0 0
  %896 = vmatpush.bf16.msra.mxu0 %v727
  %897 = vmatpush.bf16.msra.mxu0 %v547
  %898 = vmatpush.bf16.msra.mxu0 %v515
  %899 = vmatpush.bf16.msra.mxu0 %v483
  %900 = vmatmul.bf16.gmra.mxu0 %v702
  %v901 = vpop.f32.mrf.mxu0
  %v902 = vadd.f32 %v138, %v901
  %v903 = vpop.f32.mrf.mxu0
  %904 = vdwg.mxu0
  %905 = vmatpush.bf16.msra.mxu0 0
  %906 = vmatpush.bf16.msra.mxu0 0
  %907 = vmatpush.bf16.msra.mxu0 0
  %908 = vmatpush.bf16.msra.mxu0 0
  %909 = vmatpush.bf16.msra.mxu0 %v730
  %910 = vmatpush.bf16.msra.mxu0 %v548
  %911 = vmatpush.bf16.msra.mxu0 %v516
  %912 = vmatpush.bf16.msra.mxu0 %v484
  %913 = vmatmul.bf16.gmra.mxu0 %v702
  %v914 = vpop.f32.mrf.mxu0
  %v915 = vadd.f32 %v138, %v914
  %v916 = vpop.f32.mrf.mxu0
  %917 = vdwg.mxu0
  %918 = vmatpush.bf16.msra.mxu0 0
  %919 = vmatpush.bf16.msra.mxu0 0
  %920 = vmatpush.bf16.msra.mxu0 0
  %921 = vmatpush.bf16.msra.mxu0 0
  %922 = vmatpush.bf16.msra.mxu0 %v733
  %923 = vmatpush.bf16.msra.mxu0 %v549
  %924 = vmatpush.bf16.msra.mxu0 %v517
  %925 = vmatpush.bf16.msra.mxu0 %v485
  %926 = vmatmul.bf16.gmra.mxu0 %v702
  %v927 = vpop.f32.mrf.mxu0
  %v928 = vadd.f32 %v138, %v927
  %v929 = vpop.f32.mrf.mxu0
  %930 = vdwg.mxu0
  %931 = vmatpush.bf16.msra.mxu0 0
  %932 = vmatpush.bf16.msra.mxu0 0
  %933 = vmatpush.bf16.msra.mxu0 0
  %934 = vmatpush.bf16.msra.mxu0 0
  %935 = vmatpush.bf16.msra.mxu0 %v736
  %936 = vmatpush.bf16.msra.mxu0 %v550
  %937 = vmatpush.bf16.msra.mxu0 %v518
  %938 = vmatpush.bf16.msra.mxu0 %v486
  %939 = vmatmul.bf16.gmra.mxu0 %v702
  %v940 = vpop.f32.mrf.mxu0
  %v941 = vadd.f32 %v138, %v940
  %v942 = vpop.f32.mrf.mxu0
  %943 = vdwg.mxu0
  %944 = vmatpush.bf16.msra.mxu0 0
  %945 = vmatpush.bf16.msra.mxu0 0
  %946 = vmatpush.bf16.msra.mxu0 0
  %947 = vmatpush.bf16.msra.mxu0 0
  %948 = vmatpush.bf16.msra.mxu0 %v739
  %949 = vmatpush.bf16.msra.mxu0 %v551
  %950 = vmatpush.bf16.msra.mxu0 %v519
  %951 = vmatpush.bf16.msra.mxu0 %v487
  %952 = vmatmul.bf16.gmra.mxu0 %v702
  %v953 = vpop.f32.mrf.mxu0
  %v954 = vadd.f32 %v138, %v953
  %v955 = vpop.f32.mrf.mxu0
  %956 = vdwg.mxu0
  %957 = vmatpush.bf16.msra.mxu0 0
  %958 = vmatpush.bf16.msra.mxu0 0
  %959 = vmatpush.bf16.msra.mxu0 0
  %960 = vmatpush.bf16.msra.mxu0 0
  %961 = vmatpush.bf16.msra.mxu0 %v742
  %962 = vmatpush.bf16.msra.mxu0 %v552
  %963 = vmatpush.bf16.msra.mxu0 %v520
  %964 = vmatpush.bf16.msra.mxu0 %v488
  %965 = vmatmul.bf16.gmra.mxu0 %v702
  %v966 = vpop.f32.mrf.mxu0
  %v967 = vadd.f32 %v138, %v966
  %v968 = vpop.f32.mrf.mxu0
  %969 = vdwg.mxu0
  %970 = vmatpush.bf16.msra.mxu0 0
  %971 = vmatpush.bf16.msra.mxu0 0
  %972 = vmatpush.bf16.msra.mxu0 0
  %973 = vmatpush.bf16.msra.mxu0 0
  %974 = vmatpush.bf16.msra.mxu0 %v745
  %975 = vmatpush.bf16.msra.mxu0 %v553
  %976 = vmatpush.bf16.msra.mxu0 %v521
  %977 = vmatpush.bf16.msra.mxu0 %v489
  %978 = vmatmul.bf16.gmra.mxu0 %v702
  %v979 = vpop.f32.mrf.mxu0
  %v980 = vadd.f32 %v138, %v979
  %v981 = vpop.f32.mrf.mxu0
  %982 = vdwg.mxu0
  %983 = vmatpush.bf16.msra.mxu0 0
  %984 = vmatpush.bf16.msra.mxu0 0
  %985 = vmatpush.bf16.msra.mxu0 0
  %986 = vmatpush.bf16.msra.mxu0 0
  %987 = vmatpush.bf16.msra.mxu0 %v748
  %988 = vmatpush.bf16.msra.mxu0 %v554
  %989 = vmatpush.bf16.msra.mxu0 %v522
  %990 = vmatpush.bf16.msra.mxu0 %v490
  %991 = vmatmul.bf16.gmra.mxu0 %v702
  %v992 = vpop.f32.mrf.mxu0
  %v993 = vadd.f32 %v138, %v992
  %v994 = vpop.f32.mrf.mxu0
  %995 = vdwg.mxu0
  %996 = vmatpush.bf16.msra.mxu0 0
  %997 = vmatpush.bf16.msra.mxu0 0
  %998 = vmatpush.bf16.msra.mxu0 0
  %999 = vmatpush.bf16.msra.mxu0 0
  %1000 = vmatpush.bf16.msra.mxu0 %v751
  %1001 = vmatpush.bf16.msra.mxu0 %v555
  %1002 = vmatpush.bf16.msra.mxu0 %v523
  %1003 = vmatpush.bf16.msra.mxu0 %v491
  %1004 = vmatmul.bf16.gmra.mxu0 %v702
  %v1005 = vpop.f32.mrf.mxu0
  %v1006 = vadd.f32 %v138, %v1005
  %v1007 = vpop.f32.mrf.mxu0
  %1008 = vdwg.mxu0
  %1009 = vmatpush.bf16.msra.mxu0 0
  %1010 = vmatpush.bf16.msra.mxu0 0
  %1011 = vmatpush.bf16.msra.mxu0 0
  %1012 = vmatpush.bf16.msra.mxu0 0
  %1013 = vmatpush.bf16.msra.mxu0 %v754
  %1014 = vmatpush.bf16.msra.mxu0 %v556
  %1015 = vmatpush.bf16.msra.mxu0 %v524
  %1016 = vmatpush.bf16.msra.mxu0 %v492
  %1017 = vmatmul.bf16.gmra.mxu0 %v702
  %v1018 = vpop.f32.mrf.mxu0
  %v1019 = vadd.f32 %v138, %v1018
  %v1020 = vpop.f32.mrf.mxu0
  %1021 = vdwg.mxu0
  %1022 = vmatpush.bf16.msra.mxu0 0
  %1023 = vmatpush.bf16.msra.mxu0 0
  %1024 = vmatpush.bf16.msra.mxu0 0
  %1025 = vmatpush.bf16.msra.mxu0 0
  %1026 = vmatpush.bf16.msra.mxu0 %v757
  %1027 = vmatpush.bf16.msra.mxu0 %v557
  %1028 = vmatpush.bf16.msra.mxu0 %v525
  %1029 = vmatpush.bf16.msra.mxu0 %v493
  %1030 = vmatmul.bf16.gmra.mxu0 %v702
  %v1031 = vpop.f32.mrf.mxu0
  %v1032 = vadd.f32 %v138, %v1031
  %v1033 = vpop.f32.mrf.mxu0
  %1034 = vdwg.mxu0
  %1035 = vmatpush.bf16.msra.mxu0 0
  %1036 = vmatpush.bf16.msra.mxu0 0
  %1037 = vmatpush.bf16.msra.mxu0 0
  %1038 = vmatpush.bf16.msra.mxu0 0
  %1039 = vmatpush.bf16.msra.mxu0 %v760
  %1040 = vmatpush.bf16.msra.mxu0 %v558
  %1041 = vmatpush.bf16.msra.mxu0 %v526
  %1042 = vmatpush.bf16.msra.mxu0 %v494
  %1043 = vmatmul.bf16.gmra.mxu0 %v702
  %v1044 = vpop.f32.mrf.mxu0
  %v1045 = vadd.f32 %v138, %v1044
  %v1046 = vpop.f32.mrf.mxu0
  %1047 = vdwg.mxu0
  %1048 = vmatpush.bf16.msra.mxu0 0
  %1049 = vmatpush.bf16.msra.mxu0 0
  %1050 = vmatpush.bf16.msra.mxu0 0
  %1051 = vmatpush.bf16.msra.mxu0 0
  %1052 = vmatpush.bf16.msra.mxu0 %v763
  %1053 = vmatpush.bf16.msra.mxu0 %v559
  %1054 = vmatpush.bf16.msra.mxu0 %v527
  %1055 = vmatpush.bf16.msra.mxu0 %v495
  %1056 = vmatmul.bf16.gmra.mxu0 %v702
  %v1057 = vpop.f32.mrf.mxu0
  %v1058 = vadd.f32 %v138, %v1057
  %v1059 = vpop.f32.mrf.mxu0
  %1060 = vdwg.mxu0
  %1061 = vmatpush.bf16.msra.mxu0 0
  %1062 = vmatpush.bf16.msra.mxu0 0
  %1063 = vmatpush.bf16.msra.mxu0 0
  %1064 = vmatpush.bf16.msra.mxu0 0
  %1065 = vmatpush.bf16.msra.mxu0 %v766
  %1066 = vmatpush.bf16.msra.mxu0 %v560
  %1067 = vmatpush.bf16.msra.mxu0 %v528
  %1068 = vmatpush.bf16.msra.mxu0 %v496
  %1069 = vmatmul.bf16.gmra.mxu0 %v702
  %v1070 = vpop.f32.mrf.mxu0
  %v1071 = vadd.f32 %v138, %v1070
  %v1072 = vpop.f32.mrf.mxu0
  %1073 = vdwg.mxu0
  %1074 = vmatpush.bf16.msra.mxu0 0
  %1075 = vmatpush.bf16.msra.mxu0 0
  %1076 = vmatpush.bf16.msra.mxu0 0
  %1077 = vmatpush.bf16.msra.mxu0 0
  %1078 = vmatpush.bf16.msra.mxu0 %v769
  %1079 = vmatpush.bf16.msra.mxu0 %v561
  %1080 = vmatpush.bf16.msra.mxu0 %v529
  %1081 = vmatpush.bf16.msra.mxu0 %v497
  %1082 = vmatmul.bf16.gmra.mxu0 %v702
  %v1083 = vpop.f32.mrf.mxu0
  %v1084 = vadd.f32 %v138, %v1083
  %v1085 = vpop.f32.mrf.mxu0
  %1086 = vdwg.mxu0
  %1087 = vmatpush.bf16.msra.mxu0 0
  %1088 = vmatpush.bf16.msra.mxu0 0
  %1089 = vmatpush.bf16.msra.mxu0 0
  %1090 = vmatpush.bf16.msra.mxu0 0
  %1091 = vmatpush.bf16.msra.mxu0 %v772
  %1092 = vmatpush.bf16.msra.mxu0 %v562
  %1093 = vmatpush.bf16.msra.mxu0 %v530
  %1094 = vmatpush.bf16.msra.mxu0 %v498
  %1095 = vmatmul.bf16.gmra.mxu0 %v702
  %v1096 = vpop.f32.mrf.mxu0
  %v1097 = vadd.f32 %v138, %v1096
  %v1098 = vpop.f32.mrf.mxu0
  %1099 = vdwg.mxu0
  %1100 = vmatpush.bf16.msra.mxu0 0
  %1101 = vmatpush.bf16.msra.mxu0 0
  %1102 = vmatpush.bf16.msra.mxu0 0
  %1103 = vmatpush.bf16.msra.mxu0 0
  %1104 = vmatpush.bf16.msra.mxu0 %v775
  %1105 = vmatpush.bf16.msra.mxu0 %v563
  %1106 = vmatpush.bf16.msra.mxu0 %v531
  %1107 = vmatpush.bf16.msra.mxu0 %v499
  %1108 = vmatmul.bf16.gmra.mxu0 %v702
  %v1109 = vpop.f32.mrf.mxu0
  %v1110 = vadd.f32 %v138, %v1109
  %v1111 = vpop.f32.mrf.mxu0
  %1112 = vdwg.mxu0
  %1113 = vmatpush.bf16.msra.mxu0 0
  %1114 = vmatpush.bf16.msra.mxu0 0
  %1115 = vmatpush.bf16.msra.mxu0 0
  %1116 = vmatpush.bf16.msra.mxu0 0
  %1117 = vmatpush.bf16.msra.mxu0 %v778
  %1118 = vmatpush.bf16.msra.mxu0 %v564
  %1119 = vmatpush.bf16.msra.mxu0 %v532
  %1120 = vmatpush.bf16.msra.mxu0 %v500
  %1121 = vmatmul.bf16.gmra.mxu0 %v702
  %v1122 = vpop.f32.mrf.mxu0
  %v1123 = vadd.f32 %v138, %v1122
  %v1124 = vpop.f32.mrf.mxu0
  %1125 = vdwg.mxu0
  %1126 = vmatpush.bf16.msra.mxu0 0
  %1127 = vmatpush.bf16.msra.mxu0 0
  %1128 = vmatpush.bf16.msra.mxu0 0
  %1129 = vmatpush.bf16.msra.mxu0 0
  %1130 = vmatpush.bf16.msra.mxu0 %v781
  %1131 = vmatpush.bf16.msra.mxu0 %v565
  %1132 = vmatpush.bf16.msra.mxu0 %v533
  %1133 = vmatpush.bf16.msra.mxu0 %v501
  %1134 = vmatmul.bf16.gmra.mxu0 %v702
  %v1135 = vpop.f32.mrf.mxu0
  %v1136 = vadd.f32 %v138, %v1135
  %v1137 = vpop.f32.mrf.mxu0
  %1138 = vdwg.mxu0
  %1139 = vmatpush.bf16.msra.mxu0 0
  %1140 = vmatpush.bf16.msra.mxu0 0
  %1141 = vmatpush.bf16.msra.mxu0 0
  %1142 = vmatpush.bf16.msra.mxu0 0
  %1143 = vmatpush.bf16.msra.mxu0 %v784
  %1144 = vmatpush.bf16.msra.mxu0 %v566
  %1145 = vmatpush.bf16.msra.mxu0 %v534
  %1146 = vmatpush.bf16.msra.mxu0 %v502
  %1147 = vmatmul.bf16.gmra.mxu0 %v702
  %v1148 = vpop.f32.mrf.mxu0
  %v1149 = vadd.f32 %v138, %v1148
  %v1150 = vpop.f32.mrf.mxu0
  %1151 = vdwg.mxu0
  %1152 = vmatpush.bf16.msra.mxu0 0
  %1153 = vmatpush.bf16.msra.mxu0 0
  %1154 = vmatpush.bf16.msra.mxu0 0
  %1155 = vmatpush.bf16.msra.mxu0 0
  %1156 = vmatpush.bf16.msra.mxu0 %v787
  %1157 = vmatpush.bf16.msra.mxu0 %v567
  %1158 = vmatpush.bf16.msra.mxu0 %v535
  %1159 = vmatpush.bf16.msra.mxu0 %v503
  %1160 = vmatmul.bf16.gmra.mxu0 %v702
  %v1161 = vpop.f32.mrf.mxu0
  %v1162 = vadd.f32 %v138, %v1161
  %v1163 = vpop.f32.mrf.mxu0
  %1164 = vdwg.mxu0
  %1165 = vmatpush.bf16.msra.mxu0 0
  %1166 = vmatpush.bf16.msra.mxu0 0
  %1167 = vmatpush.bf16.msra.mxu0 0
  %1168 = vmatpush.bf16.msra.mxu0 0
  %1169 = vmatpush.bf16.msra.mxu0 %v790
  %1170 = vmatpush.bf16.msra.mxu0 %v568
  %1171 = vmatpush.bf16.msra.mxu0 %v536
  %1172 = vmatpush.bf16.msra.mxu0 %v504
  %1173 = vmatmul.bf16.gmra.mxu0 %v702
  %v1174 = vpop.f32.mrf.mxu0
  %v1175 = vadd.f32 %v138, %v1174
  %v1176 = vpop.f32.mrf.mxu0
  %1177 = vdwg.mxu0
  %1178 = vmatpush.bf16.msra.mxu0 0
  %1179 = vmatpush.bf16.msra.mxu0 0
  %1180 = vmatpush.bf16.msra.mxu0 0
  %1181 = vmatpush.bf16.msra.mxu0 0
  %1182 = vmatpush.bf16.msra.mxu0 %v793
  %1183 = vmatpush.bf16.msra.mxu0 %v569
  %1184 = vmatpush.bf16.msra.mxu0 %v537
  %1185 = vmatpush.bf16.msra.mxu0 %v505
  %1186 = vmatmul.bf16.gmra.mxu0 %v702
  %v1187 = vpop.f32.mrf.mxu0
  %v1188 = vadd.f32 %v138, %v1187
  %v1189 = vpop.f32.mrf.mxu0
  %1190 = vdwg.mxu0
  %1191 = vmatpush.bf16.msra.mxu0 0
  %1192 = vmatpush.bf16.msra.mxu0 0
  %1193 = vmatpush.bf16.msra.mxu0 0
  %1194 = vmatpush.bf16.msra.mxu0 0
  %1195 = vmatpush.bf16.msra.mxu0 %v796
  %1196 = vmatpush.bf16.msra.mxu0 %v570
  %1197 = vmatpush.bf16.msra.mxu0 %v538
  %1198 = vmatpush.bf16.msra.mxu0 %v506
  %1199 = vmatmul.bf16.gmra.mxu0 %v702
  %v1200 = vpop.f32.mrf.mxu0
  %v1201 = vadd.f32 %v138, %v1200
  %v1202 = vpop.f32.mrf.mxu0
  %1203 = vdwg.mxu0
  %1204 = vmatpush.bf16.msra.mxu0 0
  %1205 = vmatpush.bf16.msra.mxu0 0
  %1206 = vmatpush.bf16.msra.mxu0 0
  %1207 = vmatpush.bf16.msra.mxu0 0
  %1208 = vmatpush.bf16.msra.mxu0 %v799
  %1209 = vmatpush.bf16.msra.mxu0 %v571
  %1210 = vmatpush.bf16.msra.mxu0 %v539
  %1211 = vmatpush.bf16.msra.mxu0 %v507
  %1212 = vmatmul.bf16.gmra.mxu0 %v702
  %v1213 = vpop.f32.mrf.mxu0
  %v1214 = vadd.f32 %v138, %v1213
  %v1215 = vpop.f32.mrf.mxu0
  %1216 = vdwg.mxu0
  %vm1217 = vcmask 1043456
  %v1218 = vsel %vm1217, %v811, 0.0
  %v1219 = vsel %vm1217, %v824, 0.0
  %v1220 = vadd.f32 %v1218, %v1219
  %v1221 = vsel %vm1217, %v837, 0.0
  %v1222 = vadd.f32 %v1220, %v1221
  %v1223 = vsel %vm1217, %v850, 0.0
  %v1224 = vadd.f32 %v1222, %v1223
  %v1225 = vsel %vm1217, %v863, 0.0
  %v1226 = vadd.f32 %v1224, %v1225
  %v1227 = vsel %vm1217, %v876, 0.0
  %v1228 = vadd.f32 %v1226, %v1227
  %v1229 = vsel %vm1217, %v889, 0.0
  %v1230 = vadd.f32 %v1228, %v1229
  %v1231 = vsel %vm1217, %v902, 0.0
  %v1232 = vadd.f32 %v1230, %v1231
  %v1233 = vsel %vm1217, %v915, 0.0
  %v1234 = vadd.f32 %v1232, %v1233
  %v1235 = vsel %vm1217, %v928, 0.0
  %v1236 = vadd.f32 %v1234, %v1235
  %v1237 = vsel %vm1217, %v941, 0.0
  %v1238 = vadd.f32 %v1236, %v1237
  %v1239 = vsel %vm1217, %v954, 0.0
  %v1240 = vadd.f32 %v1238, %v1239
  %v1241 = vsel %vm1217, %v967, 0.0
  %v1242 = vadd.f32 %v1240, %v1241
  %v1243 = vsel %vm1217, %v980, 0.0
  %v1244 = vadd.f32 %v1242, %v1243
  %v1245 = vsel %vm1217, %v993, 0.0
  %v1246 = vadd.f32 %v1244, %v1245
  %v1247 = vsel %vm1217, %v1006, 0.0
  %v1248 = vadd.f32 %v1246, %v1247
  %v1249 = vsel %vm1217, %v1019, 0.0
  %v1250 = vadd.f32 %v1248, %v1249
  %v1251 = vsel %vm1217, %v1032, 0.0
  %v1252 = vadd.f32 %v1250, %v1251
  %v1253 = vsel %vm1217, %v1045, 0.0
  %v1254 = vadd.f32 %v1252, %v1253
  %v1255 = vsel %vm1217, %v1058, 0.0
  %v1256 = vadd.f32 %v1254, %v1255
  %v1257 = vsel %vm1217, %v1071, 0.0
  %v1258 = vadd.f32 %v1256, %v1257
  %v1259 = vsel %vm1217, %v1084, 0.0
  %v1260 = vadd.f32 %v1258, %v1259
  %v1261 = vsel %vm1217, %v1097, 0.0
  %v1262 = vadd.f32 %v1260, %v1261
  %v1263 = vsel %vm1217, %v1110, 0.0
  %v1264 = vadd.f32 %v1262, %v1263
  %v1265 = vsel %vm1217, %v1123, 0.0
  %v1266 = vadd.f32 %v1264, %v1265
  %v1267 = vsel %vm1217, %v1136, 0.0
  %v1268 = vadd.f32 %v1266, %v1267
  %v1269 = vsel %vm1217, %v1149, 0.0
  %v1270 = vadd.f32 %v1268, %v1269
  %v1271 = vsel %vm1217, %v1162, 0.0
  %v1272 = vadd.f32 %v1270, %v1271
  %v1273 = vsel %vm1217, %v1175, 0.0
  %v1274 = vadd.f32 %v1272, %v1273
  %v1275 = vsel %vm1217, %v1188, 0.0
  %v1276 = vadd.f32 %v1274, %v1275
  %v1277 = vsel %vm1217, %v1201, 0.0
  %v1278 = vadd.f32 %v1276, %v1277
  %v1279 = vsel %vm1217, %v1214, 0.0
  %v1280 = vadd.f32 %v1278, %v1279
  %1281 = vadd.xlane.f32.xlu0 %v1280
  %v1282 = vpop.xlane.xlu0 %1281
  %v1283 = vrcp.pop 4096.0
  %v1284 = vmul.f32 4096.0, %v1283
  %v1285 = vsub.f32 1.0, %v1284
  %v1286 = vmul.f32 %v1283, %v1285
  %v1287 = vadd.f32 %v1283, %v1286
  %vm1288 = vweird.f32 %v1283
  %v1289 = vsel %vm1288, %v1283, %v1287
  %v1290 = vmul.f32 %v1282, %v1289
  %v1291 = vsub.f32 %v811, %v1290
  %v1292 = vsub.f32 %v824, %v1290
  %v1293 = vsub.f32 %v837, %v1290
  %v1294 = vsub.f32 %v850, %v1290
  %v1295 = vsub.f32 %v863, %v1290
  %v1296 = vsub.f32 %v876, %v1290
  %v1297 = vsub.f32 %v889, %v1290
  %v1298 = vsub.f32 %v902, %v1290
  %v1299 = vsub.f32 %v915, %v1290
  %v1300 = vsub.f32 %v928, %v1290
  %v1301 = vsub.f32 %v941, %v1290
  %v1302 = vsub.f32 %v954, %v1290
  %v1303 = vsub.f32 %v967, %v1290
  %v1304 = vsub.f32 %v980, %v1290
  %v1305 = vsub.f32 %v993, %v1290
  %v1306 = vsub.f32 %v1006, %v1290
  %v1307 = vsub.f32 %v1019, %v1290
  %v1308 = vsub.f32 %v1032, %v1290
  %v1309 = vsub.f32 %v1045, %v1290
  %v1310 = vsub.f32 %v1058, %v1290
  %v1311 = vsub.f32 %v1071, %v1290
  %v1312 = vsub.f32 %v1084, %v1290
  %v1313 = vsub.f32 %v1097, %v1290
  %v1314 = vsub.f32 %v1110, %v1290
  %v1315 = vsub.f32 %v1123, %v1290
  %v1316 = vsub.f32 %v1136, %v1290
  %v1317 = vsub.f32 %v1149, %v1290
  %v1318 = vsub.f32 %v1162, %v1290
  %v1319 = vsub.f32 %v1175, %v1290
  %v1320 = vsub.f32 %v1188, %v1290
  %v1321 = vsub.f32 %v1201, %v1290
  %v1322 = vsub.f32 %v1214, %v1290
  %v1323 = vmul.f32 %v1291, %v1291
  %v1324 = vmul.f32 %v1292, %v1292
  %v1325 = vmul.f32 %v1293, %v1293
  %v1326 = vmul.f32 %v1294, %v1294
  %v1327 = vmul.f32 %v1295, %v1295
  %v1328 = vmul.f32 %v1296, %v1296
  %v1329 = vmul.f32 %v1297, %v1297
  %v1330 = vmul.f32 %v1298, %v1298
  %v1331 = vmul.f32 %v1299, %v1299
  %v1332 = vmul.f32 %v1300, %v1300
  %v1333 = vmul.f32 %v1301, %v1301
  %v1334 = vmul.f32 %v1302, %v1302
  %v1335 = vmul.f32 %v1303, %v1303
  %v1336 = vmul.f32 %v1304, %v1304
  %v1337 = vmul.f32 %v1305, %v1305
  %v1338 = vmul.f32 %v1306, %v1306
  %v1339 = vmul.f32 %v1307, %v1307
  %v1340 = vmul.f32 %v1308, %v1308
  %v1341 = vmul.f32 %v1309, %v1309
  %v1342 = vmul.f32 %v1310, %v1310
  %v1343 = vmul.f32 %v1311, %v1311
  %v1344 = vmul.f32 %v1312, %v1312
  %v1345 = vmul.f32 %v1313, %v1313
  %v1346 = vmul.f32 %v1314, %v1314
  %v1347 = vmul.f32 %v1315, %v1315
  %v1348 = vmul.f32 %v1316, %v1316
  %v1349 = vmul.f32 %v1317, %v1317
  %v1350 = vmul.f32 %v1318, %v1318
  %v1351 = vmul.f32 %v1319, %v1319
  %v1352 = vmul.f32 %v1320, %v1320
  %v1353 = vmul.f32 %v1321, %v1321
  %v1354 = vmul.f32 %v1322, %v1322
  %v1355 = vsel %vm1217, %v1323, 0.0
  %v1356 = vsel %vm1217, %v1324, 0.0
  %v1357 = vadd.f32 %v1355, %v1356
  %v1358 = vsel %vm1217, %v1325, 0.0
  %v1359 = vadd.f32 %v1357, %v1358
  %v1360 = vsel %vm1217, %v1326, 0.0
  %v1361 = vadd.f32 %v1359, %v1360
  %v1362 = vsel %vm1217, %v1327, 0.0
  %v1363 = vadd.f32 %v1361, %v1362
  %v1364 = vsel %vm1217, %v1328, 0.0
  %v1365 = vadd.f32 %v1363, %v1364
  %v1366 = vsel %vm1217, %v1329, 0.0
  %v1367 = vadd.f32 %v1365, %v1366
  %v1368 = vsel %vm1217, %v1330, 0.0
  %v1369 = vadd.f32 %v1367, %v1368
  %v1370 = vsel %vm1217, %v1331, 0.0
  %v1371 = vadd.f32 %v1369, %v1370
  %v1372 = vsel %vm1217, %v1332, 0.0
  %v1373 = vadd.f32 %v1371, %v1372
  %v1374 = vsel %vm1217, %v1333, 0.0
  %v1375 = vadd.f32 %v1373, %v1374
  %v1376 = vsel %vm1217, %v1334, 0.0
  %v1377 = vadd.f32 %v1375, %v1376
  %v1378 = vsel %vm1217, %v1335, 0.0
  %v1379 = vadd.f32 %v1377, %v1378
  %v1380 = vsel %vm1217, %v1336, 0.0
  %v1381 = vadd.f32 %v1379, %v1380
  %v1382 = vsel %vm1217, %v1337, 0.0
  %v1383 = vadd.f32 %v1381, %v1382
  %v1384 = vsel %vm1217, %v1338, 0.0
  %v1385 = vadd.f32 %v1383, %v1384
  %v1386 = vsel %vm1217, %v1339, 0.0
  %v1387 = vadd.f32 %v1385, %v1386
  %v1388 = vsel %vm1217, %v1340, 0.0
  %v1389 = vadd.f32 %v1387, %v1388
  %v1390 = vsel %vm1217, %v1341, 0.0
  %v1391 = vadd.f32 %v1389, %v1390
  %v1392 = vsel %vm1217, %v1342, 0.0
  %v1393 = vadd.f32 %v1391, %v1392
  %v1394 = vsel %vm1217, %v1343, 0.0
  %v1395 = vadd.f32 %v1393, %v1394
  %v1396 = vsel %vm1217, %v1344, 0.0
  %v1397 = vadd.f32 %v1395, %v1396
  %v1398 = vsel %vm1217, %v1345, 0.0
  %v1399 = vadd.f32 %v1397, %v1398
  %v1400 = vsel %vm1217, %v1346, 0.0
  %v1401 = vadd.f32 %v1399, %v1400
  %v1402 = vsel %vm1217, %v1347, 0.0
  %v1403 = vadd.f32 %v1401, %v1402
  %v1404 = vsel %vm1217, %v1348, 0.0
  %v1405 = vadd.f32 %v1403, %v1404
  %v1406 = vsel %vm1217, %v1349, 0.0
  %v1407 = vadd.f32 %v1405, %v1406
  %v1408 = vsel %vm1217, %v1350, 0.0
  %v1409 = vadd.f32 %v1407, %v1408
  %v1410 = vsel %vm1217, %v1351, 0.0
  %v1411 = vadd.f32 %v1409, %v1410
  %v1412 = vsel %vm1217, %v1352, 0.0
  %v1413 = vadd.f32 %v1411, %v1412
  %v1414 = vsel %vm1217, %v1353, 0.0
  %v1415 = vadd.f32 %v1413, %v1414
  %v1416 = vsel %vm1217, %v1354, 0.0
  %v1417 = vadd.f32 %v1415, %v1416
  %1418 = vadd.xlane.f32.xlu0 %v1417
  %v1419 = vpop.xlane.xlu0 %1418
  %v1420 = vmul.f32 %v1419, %v1289
  %v1421 = vld [vmem:[%s3] sm:$0xf]
  %v1422 = vadd.f32 %v1420, 1e-05
  %v1423 = vrsqrt.pop %v1422
  %v1424 = vmul.f32 %v1423, %v1422
  %v1425 = vmul.f32 %v1424, %v1423
  %v1426 = vmul.f32 0.5, %v1425
  %v1427 = vsub.f32 1.5, %v1426
  %v1428 = vmul.f32 %v1423, %v1427
  %vm1429 = vweird.f32 %v1422
  %vm1430 = vweird.f32 %v1423
  %vm1431 = vmor %vm1429, %vm1430
  %v1432 = vsel %vm1431, %v1423, %v1428
  %v1433 = vmul.f32 %v1421, %v1432
  %1435 = vset.pattern.permute.xlu0 0
  %1436 = vperm.xlu0 %1435, %v1433
  %v1437 = vpop.permute.xlu0 %1436
  %v1439 = vmul.f32 %v1291, %v1437
  %v1440 = vmul.f32 %v1292, %v1437
  %v1441 = vmul.f32 %v1293, %v1437
  %v1442 = vmul.f32 %v1294, %v1437
  %v1443 = vmul.f32 %v1295, %v1437
  %v1444 = vmul.f32 %v1296, %v1437
  %v1445 = vmul.f32 %v1297, %v1437
  %v1446 = vmul.f32 %v1298, %v1437
  %v1447 = vmul.f32 %v1299, %v1437
  %v1448 = vmul.f32 %v1300, %v1437
  %v1449 = vmul.f32 %v1301, %v1437
  %v1450 = vmul.f32 %v1302, %v1437
  %v1451 = vmul.f32 %v1303, %v1437
  %v1452 = vmul.f32 %v1304, %v1437
  %v1453 = vmul.f32 %v1305, %v1437
  %v1454 = vmul.f32 %v1306, %v1437
  %v1455 = vmul.f32 %v1307, %v1437
  %v1456 = vmul.f32 %v1308, %v1437
  %v1457 = vmul.f32 %v1309, %v1437
  %v1458 = vmul.f32 %v1310, %v1437
  %v1459 = vmul.f32 %v1311, %v1437
  %v1460 = vmul.f32 %v1312, %v1437
  %v1461 = vmul.f32 %v1313, %v1437
  %v1462 = vmul.f32 %v1314, %v1437
  %v1463 = vmul.f32 %v1315, %v1437
  %v1464 = vmul.f32 %v1316, %v1437
  %v1465 = vmul.f32 %v1317, %v1437
  %v1466 = vmul.f32 %v1318, %v1437
  %v1467 = vmul.f32 %v1319, %v1437
  %v1468 = vmul.f32 %v1320, %v1437
  %v1469 = vmul.f32 %v1321, %v1437
  %v1470 = vmul.f32 %v1322, %v1437
  %v1471 = vld [vmem:[%s4] sm:$0xf]
  %1473 = vset.pattern.permute.xlu0 0
  %1474 = vperm.xlu0 %1473, %v1471
  %v1475 = vpop.permute.xlu0 %1474
  %v1477 = vadd.f32 %v1439, %v1475
  %v1478 = vadd.f32 %v1440, %v1475
  %v1479 = vadd.f32 %v1441, %v1475
  %v1480 = vadd.f32 %v1442, %v1475
  %v1481 = vadd.f32 %v1443, %v1475
  %v1482 = vadd.f32 %v1444, %v1475
  %v1483 = vadd.f32 %v1445, %v1475
  %v1484 = vadd.f32 %v1446, %v1475
  %v1485 = vadd.f32 %v1447, %v1475
  %v1486 = vadd.f32 %v1448, %v1475
  %v1487 = vadd.f32 %v1449, %v1475
  %v1488 = vadd.f32 %v1450, %v1475
  %v1489 = vadd.f32 %v1451, %v1475
  %v1490 = vadd.f32 %v1452, %v1475
  %v1491 = vadd.f32 %v1453, %v1475
  %v1492 = vadd.f32 %v1454, %v1475
  %v1493 = vadd.f32 %v1455, %v1475
  %v1494 = vadd.f32 %v1456, %v1475
  %v1495 = vadd.f32 %v1457, %v1475
  %v1496 = vadd.f32 %v1458, %v1475
  %v1497 = vadd.f32 %v1459, %v1475
  %v1498 = vadd.f32 %v1460, %v1475
  %v1499 = vadd.f32 %v1461, %v1475
  %v1500 = vadd.f32 %v1462, %v1475
  %v1501 = vadd.f32 %v1463, %v1475
  %v1502 = vadd.f32 %v1464, %v1475
  %v1503 = vadd.f32 %v1465, %v1475
  %v1504 = vadd.f32 %v1466, %v1475
  %v1505 = vadd.f32 %v1467, %v1475
  %v1506 = vadd.f32 %v1468, %v1475
  %v1507 = vadd.f32 %v1469, %v1475
  %v1508 = vadd.f32 %v1470, %v1475
  %v1509 = vmax.f32 %v1477, 0.0
  %v1510 = vmax.f32 %v1478, 0.0
  %v1511 = vmax.f32 %v1479, 0.0
  %v1512 = vmax.f32 %v1480, 0.0
  %v1513 = vmax.f32 %v1481, 0.0
  %v1514 = vmax.f32 %v1482, 0.0
  %v1515 = vmax.f32 %v1483, 0.0
  %v1516 = vmax.f32 %v1484, 0.0
  %v1517 = vmax.f32 %v1485, 0.0
  %v1518 = vmax.f32 %v1486, 0.0
  %v1519 = vmax.f32 %v1487, 0.0
  %v1520 = vmax.f32 %v1488, 0.0
  %v1521 = vmax.f32 %v1489, 0.0
  %v1522 = vmax.f32 %v1490, 0.0
  %v1523 = vmax.f32 %v1491, 0.0
  %v1524 = vmax.f32 %v1492, 0.0
  %v1525 = vmax.f32 %v1493, 0.0
  %v1526 = vmax.f32 %v1494, 0.0
  %v1527 = vmax.f32 %v1495, 0.0
  %v1528 = vmax.f32 %v1496, 0.0
  %v1529 = vmax.f32 %v1497, 0.0
  %v1530 = vmax.f32 %v1498, 0.0
  %v1531 = vmax.f32 %v1499, 0.0
  %v1532 = vmax.f32 %v1500, 0.0
  %v1533 = vmax.f32 %v1501, 0.0
  %v1534 = vmax.f32 %v1502, 0.0
  %v1535 = vmax.f32 %v1503, 0.0
  %v1536 = vmax.f32 %v1504, 0.0
  %v1537 = vmax.f32 %v1505, 0.0
  %v1538 = vmax.f32 %v1506, 0.0
  %v1539 = vmax.f32 %v1507, 0.0
  %v1540 = vmax.f32 %v1508, 0.0
  %v1573 = vrot.slane %v1510, 4
  %v1574 = vrot.slane %v1512, 4
  %v1575 = vrot.slane %v1514, 4
  %v1576 = vrot.slane %v1516, 4
  %v1577 = vrot.slane %v1518, 4
  %v1578 = vrot.slane %v1520, 4
  %v1579 = vrot.slane %v1522, 4
  %v1580 = vrot.slane %v1524, 4
  %v1581 = vrot.slane %v1526, 4
  %v1582 = vrot.slane %v1528, 4
  %v1583 = vrot.slane %v1530, 4
  %v1584 = vrot.slane %v1532, 4
  %v1585 = vrot.slane %v1534, 4
  %v1586 = vrot.slane %v1536, 4
  %v1587 = vrot.slane %v1538, 4
  %v1588 = vrot.slane %v1540, 4
  %v1589 = vsel %vm1217, %v1509, %v1573
  %v1590 = vsel %vm1217, %v1511, %v1574
  %v1591 = vsel %vm1217, %v1513, %v1575
  %v1592 = vsel %vm1217, %v1515, %v1576
  %v1593 = vsel %vm1217, %v1517, %v1577
  %v1594 = vsel %vm1217, %v1519, %v1578
  %v1595 = vsel %vm1217, %v1521, %v1579
  %v1596 = vsel %vm1217, %v1523, %v1580
  %v1597 = vsel %vm1217, %v1525, %v1581
  %v1598 = vsel %vm1217, %v1527, %v1582
  %v1599 = vsel %vm1217, %v1529, %v1583
  %v1600 = vsel %vm1217, %v1531, %v1584
  %v1601 = vsel %vm1217, %v1533, %v1585
  %v1602 = vsel %vm1217, %v1535, %v1586
  %v1603 = vsel %vm1217, %v1537, %v1587
  %v1604 = vsel %vm1217, %v1539, %v1588
  %1621 = vst [vmem:[%s5] sm:$0xff] %v1589
  %1622 = vst [vmem:[%s5 + $0x8] sm:$0xff] %v1590
  %1623 = vst [vmem:[%s5 + $0x10] sm:$0xff] %v1591
  %1624 = vst [vmem:[%s5 + $0x18] sm:$0xff] %v1592
  %1625 = vst [vmem:[%s5 + $0x20] sm:$0xff] %v1593
  %1626 = vst [vmem:[%s5 + $0x28] sm:$0xff] %v1594
  %1627 = vst [vmem:[%s5 + $0x30] sm:$0xff] %v1595
  %1628 = vst [vmem:[%s5 + $0x38] sm:$0xff] %v1596
  %1629 = vst [vmem:[%s5 + $0x40] sm:$0xff] %v1597
  %1630 = vst [vmem:[%s5 + $0x48] sm:$0xff] %v1598
  %1631 = vst [vmem:[%s5 + $0x50] sm:$0xff] %v1599
  %1632 = vst [vmem:[%s5 + $0x58] sm:$0xff] %v1600
  %1633 = vst [vmem:[%s5 + $0x60] sm:$0xff] %v1601
  %1634 = vst [vmem:[%s5 + $0x68] sm:$0xff] %v1602
  %1635 = vst [vmem:[%s5 + $0x70] sm:$0xff] %v1603
  %1636 = vst [vmem:[%s5 + $0x78] sm:$0xff] %v1604
  // Predicated region
  $region22: #{cnn3d_encoder_forward.3} parent=0 // pred_check
    _
  $region23: #{cnn3d_encoder_forward.3} parent=0 // pred_check_branch
    %1638 = sbr.rel (0) target = $region25
  $region24: #{cnn3d_encoder_forward.3} parent=0 // pred_region
    _
  $region25: #{cnn3d_encoder_forward.3} parent=0 // pred_fallthru
    _
  // Predicated region
  $region26: #{cnn3d_encoder_forward.3} parent=0 // pred_check
    _
  $region27: #{cnn3d_encoder_forward.3} parent=0 // pred_check_branch
    %1640 = sbr.rel (0) target = $region29
  $region28: #{cnn3d_encoder_forward.3} parent=0 // pred_region
    _
  $region29: #{cnn3d_encoder_forward.3} parent=0 // pred_fallthru
    _

// kernel: cnn3d_encoder_forward.4
$region0: #{cnn3d_encoder_forward.4}
  #allocation0 [shape = 'u32[]', space=smem, size = 0x4, offset = 0x4, fixed_abs, tag = 'smem constant byte address 0x4 - core index']
  #allocation1 [shape = 'u32[72,128]{1,0:T(1,128)}', space=vmem, size = 0x9000, scoped, tag = 'internal scratch']
  %s0 = inlined_call_operand.vmem [shape: bf16[108,512], index: 0, kind: input, shape index: {}]
  %s1 = inlined_call_operand.vmem [shape: bf16[3,108], index: 1, kind: input, shape index: {}]
  %s2 = inlined_call_operand.vmem [shape: f32[3,1], index: 2, kind: input, shape index: {}]
  %s3 = inlined_call_operand.vmem [shape: f32[3,1], index: 3, kind: input, shape index: {}]
  %s4 = inlined_call_operand.vmem [shape: f32[3,1], index: 4, kind: input, shape index: {}]
  %s5 = inlined_call_operand.vmem [shape: f32[3,512], index: 5, kind: output, shape index: {}]
  %s6 = sld [smem:[#allocation0]]
  $region30: #{cnn3d_encoder_forward.4} parent=0
    _
  %s8 = ssub.s32 1, %s6
  %s9 = scalar_select 0, %s8, %s6
  // Predicated region
  $region2: #{cnn3d_encoder_forward.4} parent=0 // pred_check
    _
  $region3: #{cnn3d_encoder_forward.4} parent=0 // pred_check_branch
    %11 = sbr.rel (0) target = $region5
  $region4: #{cnn3d_encoder_forward.4} parent=0 // pred_region
    _
  $region5: #{cnn3d_encoder_forward.4} parent=0 // pred_fallthru
    _
  // Predicated region
  $region6: #{cnn3d_encoder_forward.4} parent=0 // pred_check
    _
  $region7: #{cnn3d_encoder_forward.4} parent=0 // pred_check_branch
    %13 = sbr.rel (0) target = $region9
  $region8: #{cnn3d_encoder_forward.4} parent=0 // pred_region
    _
  $region9: #{cnn3d_encoder_forward.4} parent=0 // pred_fallthru
    _
  // Predicated region
  $region10: #{cnn3d_encoder_forward.4} parent=0 // pred_check
    _
  $region11: #{cnn3d_encoder_forward.4} parent=0 // pred_check_branch
    %15 = sbr.rel (0) target = $region13
  $region12: #{cnn3d_encoder_forward.4} parent=0 // pred_region
    _
  $region13: #{cnn3d_encoder_forward.4} parent=0 // pred_fallthru
    _
  // Predicated region
  $region14: #{cnn3d_encoder_forward.4} parent=0 // pred_check
    _
  $region15: #{cnn3d_encoder_forward.4} parent=0 // pred_check_branch
    %17 = sbr.rel (0) target = $region17
  $region16: #{cnn3d_encoder_forward.4} parent=0 // pred_region
    _
  $region17: #{cnn3d_encoder_forward.4} parent=0 // pred_fallthru
    _
  // Predicated region
  $region18: #{cnn3d_encoder_forward.4} parent=0 // pred_check
    _
  $region19: #{cnn3d_encoder_forward.4} parent=0 // pred_check_branch
    %19 = sbr.rel (0) target = $region21
  $region20: #{cnn3d_encoder_forward.4} parent=0 // pred_region
    _
  $region21: #{cnn3d_encoder_forward.4} parent=0 // pred_fallthru
    _
  %v21 = vld [vmem:[%s1] sm:$0x3]
  %v22 = vld [vmem:[%s0] sm:$0xff]
  %v23 = vld [vmem:[%s0 + $0x8] sm:$0xff]
  %v24 = vld [vmem:[%s0 + $0x10] sm:$0xff]
  %v25 = vld [vmem:[%s0 + $0x18] sm:$0xff]
  %v26 = vld [vmem:[%s0 + $0x20] sm:$0xff]
  %v27 = vld [vmem:[%s0 + $0x28] sm:$0xff]
  %v28 = vld [vmem:[%s0 + $0x30] sm:$0xff]
  %v29 = vld [vmem:[%s0 + $0x38] sm:$0xff]
  %v30 = vld [vmem:[%s0 + $0x40] sm:$0xff]
  %v31 = vld [vmem:[%s0 + $0x48] sm:$0xff]
  %v32 = vld [vmem:[%s0 + $0x50] sm:$0xff]
  %v33 = vld [vmem:[%s0 + $0x58] sm:$0xff]
  %v34 = vld [vmem:[%s0 + $0x60] sm:$0xff]
  %v35 = vld [vmem:[%s0 + $0x68] sm:$0xff]
  %v36 = vld [vmem:[%s0 + $0x70] sm:$0xff]
  %v37 = vld [vmem:[%s0 + $0x78] sm:$0xff]
  %v38 = vld [vmem:[%s0 + $0x80] sm:$0xff]
  %v39 = vld [vmem:[%s0 + $0x88] sm:$0xff]
  %v40 = vld [vmem:[%s0 + $0x90] sm:$0xff]
  %v41 = vld [vmem:[%s0 + $0x98] sm:$0xff]
  %v42 = vld [vmem:[%s0 + $0xa0] sm:$0xff]
  %v43 = vld [vmem:[%s0 + $0xa8] sm:$0xff]
  %v44 = vld [vmem:[%s0 + $0xb0] sm:$0xff]
  %v45 = vld [vmem:[%s0 + $0xb8] sm:$0xff]
  %v46 = vld [vmem:[%s0 + $0xc0] sm:$0xff]
  %v47 = vld [vmem:[%s0 + $0xc8] sm:$0xff]
  %v48 = vld [vmem:[%s0 + $0xd0] sm:$0x33]
  %v49 = vld [vmem:[%s0 + $0xd8] sm:$0x33]
  %v50 = vld [vmem:[%s2] sm:$0x7]
  %52 = vset.pattern.permute.xlu0 0
  %53 = vperm.xlu0 %52, %v50
  %v54 = vpop.permute.xlu0 %53
  %v84 = vunpack.c.l.b16 %v22
  %v85 = vunpack.c.h.b16 %v22
  %v86 = vunpack.c.l.b16 %v23
  %v87 = vunpack.c.h.b16 %v23
  %v88 = vunpack.c.l.b16 %v24
  %v89 = vunpack.c.h.b16 %v24
  %v90 = vunpack.c.l.b16 %v25
  %v91 = vunpack.c.h.b16 %v25
  %v92 = vunpack.c.l.b16 %v26
  %v93 = vunpack.c.h.b16 %v26
  %v94 = vunpack.c.l.b16 %v27
  %v95 = vunpack.c.h.b16 %v27
  %v96 = vunpack.c.l.b16 %v28
  %v97 = vunpack.c.h.b16 %v28
  %v98 = vunpack.c.l.b16 %v29
  %v99 = vunpack.c.h.b16 %v29
  %v100 = vunpack.c.l.b16 %v30
  %v101 = vunpack.c.h.b16 %v30
  %v102 = vunpack.c.l.b16 %v31
  %v103 = vunpack.c.h.b16 %v31
  %v104 = vunpack.c.l.b16 %v32
  %v105 = vunpack.c.h.b16 %v32
  %v106 = vunpack.c.l.b16 %v33
  %v107 = vunpack.c.h.b16 %v33
  %v108 = vunpack.c.l.b16 %v34
  %v109 = vunpack.c.h.b16 %v34
  %v110 = vunpack.c.l.b16 %v35
  %v111 = vunpack.c.h.b16 %v35
  %v112 = vunpack.c.l.b16 %v36
  %v113 = vunpack.c.h.b16 %v36
  %v114 = vunpack.c.l.b16 %v37
  %v115 = vunpack.c.h.b16 %v37
  %v116 = vunpack.c.l.b16 %v38
  %v117 = vunpack.c.h.b16 %v38
  %v118 = vunpack.c.l.b16 %v39
  %v119 = vunpack.c.h.b16 %v39
  %v120 = vunpack.c.l.b16 %v40
  %v121 = vunpack.c.h.b16 %v40
  %v122 = vunpack.c.l.b16 %v41
  %v123 = vunpack.c.h.b16 %v41
  %v124 = vunpack.c.l.b16 %v42
  %v125 = vunpack.c.h.b16 %v42
  %v126 = vunpack.c.l.b16 %v43
  %v127 = vunpack.c.h.b16 %v43
  %v128 = vunpack.c.l.b16 %v44
  %v129 = vunpack.c.h.b16 %v44
  %v130 = vunpack.c.l.b16 %v45
  %v131 = vunpack.c.h.b16 %v45
  %v132 = vunpack.c.l.b16 %v46
  %v133 = vunpack.c.h.b16 %v46
  %v134 = vunpack.c.l.b16 %v47
  %v135 = vunpack.c.h.b16 %v47
  %v136 = vunpack.c.l.b16 %v48
  %v137 = vunpack.c.h.b16 %v48
  %v138 = vunpack.c.l.b16 %v49
  %v139 = vunpack.c.h.b16 %v49
  %v140 = vpack.c.b16 %v88, %v84
  %v141 = vpack.c.b16 %v89, %v85
  %v142 = vpack.c.b16 %v90, %v86
  %v143 = vpack.c.b16 %v91, %v87
  %v144 = vpack.c.b16 %v96, %v92
  %v145 = vpack.c.b16 %v97, %v93
  %v146 = vpack.c.b16 %v98, %v94
  %v147 = vpack.c.b16 %v99, %v95
  %v148 = vpack.c.b16 %v104, %v100
  %v149 = vpack.c.b16 %v105, %v101
  %v150 = vpack.c.b16 %v106, %v102
  %v151 = vpack.c.b16 %v107, %v103
  %v152 = vpack.c.b16 %v112, %v108
  %v153 = vpack.c.b16 %v113, %v109
  %v154 = vpack.c.b16 %v114, %v110
  %v155 = vpack.c.b16 %v115, %v111
  %v156 = vpack.c.b16 %v120, %v116
  %v157 = vpack.c.b16 %v121, %v117
  %v158 = vpack.c.b16 %v122, %v118
  %v159 = vpack.c.b16 %v123, %v119
  %v160 = vpack.c.b16 %v128, %v124
  %v161 = vpack.c.b16 %v129, %v125
  %v162 = vpack.c.b16 %v130, %v126
  %v163 = vpack.c.b16 %v131, %v127
  %v164 = vpack.c.b16 %v136, %v132
  %v165 = vpack.c.b16 %v137, %v133
  %v166 = vpack.c.b16 %v138, %v134
  %v167 = vpack.c.b16 %v139, %v135
  %vm192 = vcmask 883712
  %v194 = vsel %vm192, %v21, 0
  %vm196 = vcmask 1045504
  %v198 = vsel %vm196, %v164, 0
  %v201 = vsel %vm196, %v165, 0
  %v204 = vsel %vm196, %v166, 0
  %v207 = vsel %vm196, %v167, 0
  %209 = vmatpush.bf16.msra.mxu0 0
  %210 = vmatpush.bf16.msra.mxu0 %v198
  %211 = vmatpush.bf16.msra.mxu0 %v160
  %212 = vmatpush.bf16.msra.mxu0 %v156
  %213 = vmatpush.bf16.msra.mxu0 %v152
  %214 = vmatpush.bf16.msra.mxu0 %v148
  %215 = vmatpush.bf16.msra.mxu0 %v144
  %216 = vmatpush.bf16.msra.mxu0 %v140
  %217 = vmatmul.bf16.gmra.mxu0 %v194
  %v218 = vpop.f32.mrf.mxu0
  %v219 = vadd.f32 %v54, %v218
  %v220 = vpop.f32.mrf.mxu0
  %221 = vdwg.mxu0
  %222 = vmatpush.bf16.msra.mxu0 0
  %223 = vmatpush.bf16.msra.mxu0 %v201
  %224 = vmatpush.bf16.msra.mxu0 %v161
  %225 = vmatpush.bf16.msra.mxu0 %v157
  %226 = vmatpush.bf16.msra.mxu0 %v153
  %227 = vmatpush.bf16.msra.mxu0 %v149
  %228 = vmatpush.bf16.msra.mxu0 %v145
  %229 = vmatpush.bf16.msra.mxu0 %v141
  %230 = vmatmul.bf16.gmra.mxu0 %v194
  %v231 = vpop.f32.mrf.mxu0
  %v232 = vadd.f32 %v54, %v231
  %v233 = vpop.f32.mrf.mxu0
  %234 = vdwg.mxu0
  %235 = vmatpush.bf16.msra.mxu0 0
  %236 = vmatpush.bf16.msra.mxu0 %v204
  %237 = vmatpush.bf16.msra.mxu0 %v162
  %238 = vmatpush.bf16.msra.mxu0 %v158
  %239 = vmatpush.bf16.msra.mxu0 %v154
  %240 = vmatpush.bf16.msra.mxu0 %v150
  %241 = vmatpush.bf16.msra.mxu0 %v146
  %242 = vmatpush.bf16.msra.mxu0 %v142
  %243 = vmatmul.bf16.gmra.mxu0 %v194
  %v244 = vpop.f32.mrf.mxu0
  %v245 = vadd.f32 %v54, %v244
  %v246 = vpop.f32.mrf.mxu0
  %247 = vdwg.mxu0
  %248 = vmatpush.bf16.msra.mxu0 0
  %249 = vmatpush.bf16.msra.mxu0 %v207
  %250 = vmatpush.bf16.msra.mxu0 %v163
  %251 = vmatpush.bf16.msra.mxu0 %v159
  %252 = vmatpush.bf16.msra.mxu0 %v155
  %253 = vmatpush.bf16.msra.mxu0 %v151
  %254 = vmatpush.bf16.msra.mxu0 %v147
  %255 = vmatpush.bf16.msra.mxu0 %v143
  %256 = vmatmul.bf16.gmra.mxu0 %v194
  %v257 = vpop.f32.mrf.mxu0
  %v258 = vadd.f32 %v54, %v257
  %v259 = vpop.f32.mrf.mxu0
  %260 = vdwg.mxu0
  %vm261 = vcmask 1042432
  %v262 = vsel %vm261, %v219, 0.0
  %v263 = vsel %vm261, %v232, 0.0
  %v264 = vadd.f32 %v262, %v263
  %v265 = vsel %vm261, %v245, 0.0
  %v266 = vadd.f32 %v264, %v265
  %v267 = vsel %vm261, %v258, 0.0
  %v268 = vadd.f32 %v266, %v267
  %269 = vadd.xlane.f32.xlu0 %v268
  %v270 = vpop.xlane.xlu0 %269
  %v271 = vrcp.pop 512.0
  %v272 = vmul.f32 512.0, %v271
  %v273 = vsub.f32 1.0, %v272
  %v274 = vmul.f32 %v271, %v273
  %v275 = vadd.f32 %v271, %v274
  %vm276 = vweird.f32 %v271
  %v277 = vsel %vm276, %v271, %v275
  %v278 = vmul.f32 %v270, %v277
  %v279 = vsub.f32 %v219, %v278
  %v280 = vsub.f32 %v232, %v278
  %v281 = vsub.f32 %v245, %v278
  %v282 = vsub.f32 %v258, %v278
  %v283 = vmul.f32 %v279, %v279
  %v284 = vmul.f32 %v280, %v280
  %v285 = vmul.f32 %v281, %v281
  %v286 = vmul.f32 %v282, %v282
  %v287 = vsel %vm261, %v283, 0.0
  %v288 = vsel %vm261, %v284, 0.0
  %v289 = vadd.f32 %v287, %v288
  %v290 = vsel %vm261, %v285, 0.0
  %v291 = vadd.f32 %v289, %v290
  %v292 = vsel %vm261, %v286, 0.0
  %v293 = vadd.f32 %v291, %v292
  %294 = vadd.xlane.f32.xlu0 %v293
  %v295 = vpop.xlane.xlu0 %294
  %v296 = vmul.f32 %v295, %v277
  %v297 = vld [vmem:[%s3] sm:$0x7]
  %v298 = vadd.f32 %v296, 1e-05
  %v299 = vrsqrt.pop %v298
  %v300 = vmul.f32 %v299, %v298
  %v301 = vmul.f32 %v300, %v299
  %v302 = vmul.f32 0.5, %v301
  %v303 = vsub.f32 1.5, %v302
  %v304 = vmul.f32 %v299, %v303
  %vm305 = vweird.f32 %v298
  %vm306 = vweird.f32 %v299
  %vm307 = vmor %vm305, %vm306
  %v308 = vsel %vm307, %v299, %v304
  %v309 = vmul.f32 %v297, %v308
  %311 = vset.pattern.permute.xlu0 0
  %312 = vperm.xlu0 %311, %v309
  %v313 = vpop.permute.xlu0 %312
  %v315 = vmul.f32 %v279, %v313
  %v316 = vmul.f32 %v280, %v313
  %v317 = vmul.f32 %v281, %v313
  %v318 = vmul.f32 %v282, %v313
  %v319 = vld [vmem:[%s4] sm:$0x7]
  %321 = vset.pattern.permute.xlu0 0
  %322 = vperm.xlu0 %321, %v319
  %v323 = vpop.permute.xlu0 %322
  %v325 = vadd.f32 %v315, %v323
  %v326 = vadd.f32 %v316, %v323
  %v327 = vadd.f32 %v317, %v323
  %v328 = vadd.f32 %v318, %v323
  %v329 = vmax.f32 %v325, 0.0
  %v330 = vmax.f32 %v326, 0.0
  %v331 = vmax.f32 %v327, 0.0
  %v332 = vmax.f32 %v328, 0.0
  %v337 = vrot.slane %v330, 4
  %v338 = vrot.slane %v332, 4
  %vm339 = vcmask 1043456
  %v340 = vsel %vm339, %v329, %v337
  %v341 = vsel %vm339, %v331, %v338
  %344 = vst [vmem:[%s5] sm:$0x77] %v340
  %345 = vst [vmem:[%s5 + $0x8] sm:$0x77] %v341
  // Predicated region
  $region22: #{cnn3d_encoder_forward.4} parent=0 // pred_check
    _
  $region23: #{cnn3d_encoder_forward.4} parent=0 // pred_check_branch
    %347 = sbr.rel (0) target = $region25
  $region24: #{cnn3d_encoder_forward.4} parent=0 // pred_region
    _
  $region25: #{cnn3d_encoder_forward.4} parent=0 // pred_fallthru
    _
  // Predicated region
  $region26: #{cnn3d_encoder_forward.4} parent=0 // pred_check
    _
  $region27: #{cnn3d_encoder_forward.4} parent=0 // pred_check_branch
    %349 = sbr.rel (0) target = $region29
  $region28: #{cnn3d_encoder_forward.4} parent=0 // pred_region
    _
  $region29: #{cnn3d_encoder_forward.4} parent=0 // pred_fallthru
    _

// kernel: cnn3d_encoder_forward.5
$region0: #{cnn3d_encoder_forward.5}
  #allocation0 [shape = 'u32[]', space=smem, size = 0x4, offset = 0x4, fixed_abs, tag = 'smem constant byte address 0x4 - core index']
  #allocation1 [shape = 'u32[72,128]{1,0:T(1,128)}', space=vmem, size = 0x9000, scoped, tag = 'internal scratch']
  %s0 = inlined_call_operand.vmem [shape: f32[2,96], index: 0, kind: input, shape index: {}]
  %s1 = inlined_call_operand.vmem [shape: bf16[96,64], index: 1, kind: input, shape index: {}]
  %s2 = inlined_call_operand.vmem [shape: f32[1,64], index: 2, kind: input, shape index: {}]
  %s3 = inlined_call_operand.vmem [shape: f32[1,64], index: 3, kind: input, shape index: {}]
  %s4 = inlined_call_operand.vmem [shape: f32[1,64], index: 4, kind: input, shape index: {}]
  %s5 = inlined_call_operand.vmem [shape: bf16[64,32], index: 5, kind: input, shape index: {}]
  %s6 = inlined_call_operand.vmem [shape: f32[1,32], index: 6, kind: input, shape index: {}]
  %s7 = inlined_call_operand.vmem [shape: f32[1,32], index: 7, kind: input, shape index: {}]
  %s8 = inlined_call_operand.vmem [shape: f32[1,32], index: 8, kind: input, shape index: {}]
  %s9 = inlined_call_operand.vmem [shape: bf16[32,16], index: 9, kind: input, shape index: {}]
  %s10 = inlined_call_operand.vmem [shape: f32[1,16], index: 10, kind: input, shape index: {}]
  %s11 = inlined_call_operand.hbm [shape: f32[2,16], index: 11, kind: output, shape index: {}]
  %s12 = sld [smem:[#allocation0]]
  $region54: #{cnn3d_encoder_forward.5} parent=0
    _
  %s14 = ssub.s32 1, %s12
  %s15 = scalar_select 0, %s14, %s12
  $region1: #{cnn3d_encoder_forward.5} parent=0
    #allocation2 [shape = 'u8[1024]{0}', space=vmem, size = 0x400, scoped, tag = 'output window, operand 0, single buffered']
    #allocation3 [shape = 's32[1]{0}', space=sflag, size = 0x4, scoped, tag = 'scoped memory for cnn3d_encoder_forward.5']
    %16 = vsyncpa [#allocation3], 0
    // Predicated region
    $region2: #{cnn3d_encoder_forward.5} parent=1 // pred_check
      _
    $region3: #{cnn3d_encoder_forward.5} parent=1 // pred_check_branch
      %18 = sbr.rel (0) target = $region5
    $region4: #{cnn3d_encoder_forward.5} parent=1 // pred_region
      _
    $region5: #{cnn3d_encoder_forward.5} parent=1 // pred_fallthru
      _
    // Predicated region
    $region6: #{cnn3d_encoder_forward.5} parent=1 // pred_check
      _
    $region7: #{cnn3d_encoder_forward.5} parent=1 // pred_check_branch
      %20 = sbr.rel (0) target = $region9
    $region8: #{cnn3d_encoder_forward.5} parent=1 // pred_region
      _
    $region9: #{cnn3d_encoder_forward.5} parent=1 // pred_fallthru
      _
    // Predicated region
    $region10: #{cnn3d_encoder_forward.5} parent=1 // pred_check
      _
    $region11: #{cnn3d_encoder_forward.5} parent=1 // pred_check_branch
      %22 = sbr.rel (0) target = $region13
    $region12: #{cnn3d_encoder_forward.5} parent=1 // pred_region
      _
    $region13: #{cnn3d_encoder_forward.5} parent=1 // pred_fallthru
      _
    // Predicated region
    $region14: #{cnn3d_encoder_forward.5} parent=1 // pred_check
      _
    $region15: #{cnn3d_encoder_forward.5} parent=1 // pred_check_branch
      %24 = sbr.rel (0) target = $region17
    $region16: #{cnn3d_encoder_forward.5} parent=1 // pred_region
      _
    $region17: #{cnn3d_encoder_forward.5} parent=1 // pred_fallthru
      _
    // Predicated region
    $region18: #{cnn3d_encoder_forward.5} parent=1 // pred_check
      _
    $region19: #{cnn3d_encoder_forward.5} parent=1 // pred_check_branch
      %26 = sbr.rel (0) target = $region21
    $region20: #{cnn3d_encoder_forward.5} parent=1 // pred_region
      _
    $region21: #{cnn3d_encoder_forward.5} parent=1 // pred_fallthru
      _
    // Predicated region
    $region22: #{cnn3d_encoder_forward.5} parent=1 // pred_check
      _
    $region23: #{cnn3d_encoder_forward.5} parent=1 // pred_check_branch
      %28 = sbr.rel (0) target = $region25
    $region24: #{cnn3d_encoder_forward.5} parent=1 // pred_region
      _
    $region25: #{cnn3d_encoder_forward.5} parent=1 // pred_fallthru
      _
    // Predicated region
    $region26: #{cnn3d_encoder_forward.5} parent=1 // pred_check
      _
    $region27: #{cnn3d_encoder_forward.5} parent=1 // pred_check_branch
      %30 = sbr.rel (0) target = $region29
    $region28: #{cnn3d_encoder_forward.5} parent=1 // pred_region
      _
    $region29: #{cnn3d_encoder_forward.5} parent=1 // pred_fallthru
      _
    // Predicated region
    $region30: #{cnn3d_encoder_forward.5} parent=1 // pred_check
      _
    $region31: #{cnn3d_encoder_forward.5} parent=1 // pred_check_branch
      %32 = sbr.rel (0) target = $region33
    $region32: #{cnn3d_encoder_forward.5} parent=1 // pred_region
      _
    $region33: #{cnn3d_encoder_forward.5} parent=1 // pred_fallthru
      _
    // Predicated region
    $region34: #{cnn3d_encoder_forward.5} parent=1 // pred_check
      _
    $region35: #{cnn3d_encoder_forward.5} parent=1 // pred_check_branch
      %34 = sbr.rel (0) target = $region37
    $region36: #{cnn3d_encoder_forward.5} parent=1 // pred_region
      _
    $region37: #{cnn3d_encoder_forward.5} parent=1 // pred_fallthru
      _
    // Predicated region
    $region38: #{cnn3d_encoder_forward.5} parent=1 // pred_check
      _
    $region39: #{cnn3d_encoder_forward.5} parent=1 // pred_check_branch
      %36 = sbr.rel (0) target = $region41
    $region40: #{cnn3d_encoder_forward.5} parent=1 // pred_region
      _
    $region41: #{cnn3d_encoder_forward.5} parent=1 // pred_fallthru
      _
    // Predicated region
    $region42: #{cnn3d_encoder_forward.5} parent=1 // pred_check
      _
    $region43: #{cnn3d_encoder_forward.5} parent=1 // pred_check_branch
      %38 = sbr.rel (0) target = $region45
    $region44: #{cnn3d_encoder_forward.5} parent=1 // pred_region
      _
    $region45: #{cnn3d_encoder_forward.5} parent=1 // pred_fallthru
      _
    %v40 = vld [vmem:[%s0] sm:$0x3]
    %v41 = vpack.c.bf16 %v40, %v40
    %v42 = vld [vmem:[%s1] sm:$0xf]
    %v43 = vld [vmem:[%s1 + $0x4] sm:$0xf]
    %v44 = vld [vmem:[%s1 + $0x8] sm:$0xf]
    %v45 = vld [vmem:[%s1 + $0xc] sm:$0xf]
    %v46 = vld [vmem:[%s1 + $0x10] sm:$0xf]
    %v47 = vld [vmem:[%s1 + $0x14] sm:$0xf]
    %v48 = vld [vmem:[%s1 + $0x18] sm:$0xf]
    %v49 = vld [vmem:[%s1 + $0x1c] sm:$0xf]
    %v50 = vld [vmem:[%s1 + $0x20] sm:$0xf]
    %v51 = vld [vmem:[%s1 + $0x24] sm:$0xf]
    %v52 = vld [vmem:[%s1 + $0x28] sm:$0xf]
    %v53 = vld [vmem:[%s1 + $0x2c] sm:$0xf]
    %v54 = vld [vmem:[%s2] sm:$0x1]
    %v56 = vperm.slane %v54, 0
    %v70 = vunpack.c.l.b16 %v42
    %v71 = vunpack.c.l.b16 %v43
    %v72 = vunpack.c.l.b16 %v44
    %v73 = vunpack.c.l.b16 %v45
    %v74 = vunpack.c.l.b16 %v46
    %v75 = vunpack.c.l.b16 %v47
    %v76 = vunpack.c.l.b16 %v48
    %v77 = vunpack.c.l.b16 %v49
    %v78 = vunpack.c.l.b16 %v50
    %v79 = vunpack.c.l.b16 %v51
    %v80 = vunpack.c.l.b16 %v52
    %v81 = vunpack.c.l.b16 %v53
    %v82 = vpack.c.b16 %v71, %v70
    %v83 = vpack.c.b16 %v73, %v72
    %v84 = vpack.c.b16 %v75, %v74
    %v85 = vpack.c.b16 %v77, %v76
    %v86 = vpack.c.b16 %v79, %v78
    %v87 = vpack.c.b16 %v81, %v80
    %vm94 = vcmask 785408
    %v96 = vsel %vm94, %v41, 0
    %98 = vmatpush.bf16.msra.mxu0 0
    %99 = vmatpush.bf16.msra.mxu0 0
    %100 = vmatpush.bf16.msra.mxu0 %v87
    %101 = vmatpush.bf16.msra.mxu0 %v86
    %102 = vmatpush.bf16.msra.mxu0 %v85
    %103 = vmatpush.bf16.msra.mxu0 %v84
    %104 = vmatpush.bf16.msra.mxu0 %v83
    %105 = vmatpush.bf16.msra.mxu0 %v82
    %106 = vmatmul.bf16.gmra.mxu0 %v96
    %v107 = vpop.f32.mrf.mxu0
    %v108 = vadd.f32 %v56, %v107
    %v109 = vpop.f32.mrf.mxu0
    %110 = vdwg.mxu0
    %vm111 = vcmask 517120
    %v112 = vsel %vm111, %v108, 0.0
    %v113 = vrot.slane %v112, 4
    %v114 = vadd.f32 %v112, %v113
    %v115 = vrot.slane %v114, 2
    %v116 = vadd.f32 %v114, %v115
    %v117 = vrot.slane %v116, 1
    %v118 = vadd.f32 %v116, %v117
    %v119 = vrcp.pop 2.0
    %v120 = vmul.f32 2.0, %v119
    %v121 = vsub.f32 1.0, %v120
    %v122 = vmul.f32 %v119, %v121
    %v123 = vadd.f32 %v119, %v122
    %vm124 = vweird.f32 %v119
    %v125 = vsel %vm124, %v119, %v123
    %v126 = vmul.f32 %v118, %v125
    %v127 = vsub.f32 %v108, %v126
    %v128 = vmul.f32 %v127, %v127
    %v129 = vsel %vm111, %v128, 0.0
    %v130 = vrot.slane %v129, 4
    %v131 = vadd.f32 %v129, %v130
    %v132 = vrot.slane %v131, 2
    %v133 = vadd.f32 %v131, %v132
    %v134 = vrot.slane %v133, 1
    %v135 = vadd.f32 %v133, %v134
    %v136 = vmul.f32 %v135, %v125
    %v137 = vld [vmem:[%s3] sm:$0x1]
    %v138 = vadd.f32 %v136, 1e-05
    %v139 = vrsqrt.pop %v138
    %v140 = vmul.f32 %v139, %v138
    %v141 = vmul.f32 %v140, %v139
    %v142 = vmul.f32 0.5, %v141
    %v143 = vsub.f32 1.5, %v142
    %v144 = vmul.f32 %v139, %v143
    %vm145 = vweird.f32 %v138
    %vm146 = vweird.f32 %v139
    %vm147 = vmor %vm145, %vm146
    %v148 = vsel %vm147, %v139, %v144
    %v149 = vmul.f32 %v137, %v148
    %v151 = vperm.slane %v149, 0
    %v153 = vmul.f32 %v127, %v151
    %v154 = vld [vmem:[%s4] sm:$0x1]
    %v156 = vperm.slane %v154, 0
    %v158 = vadd.f32 %v153, %v156
    %v159 = vmax.f32 %v158, 0.0
    %v160 = vpack.c.bf16 %v159, %v159
    %v161 = vld [vmem:[%s5] sm:$0xf]
    %v162 = vld [vmem:[%s5 + $0x4] sm:$0xf]
    %v163 = vld [vmem:[%s5 + $0x8] sm:$0xf]
    %v164 = vld [vmem:[%s5 + $0xc] sm:$0xf]
    %v165 = vld [vmem:[%s5 + $0x10] sm:$0xf]
    %v166 = vld [vmem:[%s5 + $0x14] sm:$0xf]
    %v167 = vld [vmem:[%s5 + $0x18] sm:$0xf]
    %v168 = vld [vmem:[%s5 + $0x1c] sm:$0xf]
    %v169 = vld [vmem:[%s6] sm:$0x1]
    %v171 = vperm.slane %v169, 0
    %v181 = vunpack.c.l.b16 %v161
    %v182 = vunpack.c.l.b16 %v162
    %v183 = vunpack.c.l.b16 %v163
    %v184 = vunpack.c.l.b16 %v164
    %v185 = vunpack.c.l.b16 %v165
    %v186 = vunpack.c.l.b16 %v166
    %v187 = vunpack.c.l.b16 %v167
    %v188 = vunpack.c.l.b16 %v168
    %v189 = vpack.c.b16 %v182, %v181
    %v190 = vpack.c.b16 %v184, %v183
    %v191 = vpack.c.b16 %v186, %v185
    %v192 = vpack.c.b16 %v188, %v187
    %vm197 = vcmask 523264
    %v199 = vsel %vm197, %v160, 0
    %201 = vmatpush.bf16.msra.mxu0 0
    %202 = vmatpush.bf16.msra.mxu0 0
    %203 = vmatpush.bf16.msra.mxu0 0
    %204 = vmatpush.bf16.msra.mxu0 0
    %205 = vmatpush.bf16.msra.mxu0 %v192
    %206 = vmatpush.bf16.msra.mxu0 %v191
    %207 = vmatpush.bf16.msra.mxu0 %v190
    %208 = vmatpush.bf16.msra.mxu0 %v189
    %209 = vmatmul.bf16.gmra.mxu0 %v199
    %v210 = vpop.f32.mrf.mxu0
    %v211 = vadd.f32 %v171, %v210
    %v212 = vpop.f32.mrf.mxu0
    %213 = vdwg.mxu0
    %vm214 = vcmask 254976
    %v215 = vsel %vm214, %v211, 0.0
    %v216 = vrot.slane %v215, 4
    %v217 = vadd.f32 %v215, %v216
    %v218 = vrot.slane %v217, 2
    %v219 = vadd.f32 %v217, %v218
    %v220 = vrot.slane %v219, 1
    %v221 = vadd.f32 %v219, %v220
    %v222 = vmul.f32 %v221, %v125
    %v223 = vsub.f32 %v211, %v222
    %v224 = vmul.f32 %v223, %v223
    %v225 = vsel %vm214, %v224, 0.0
    %v226 = vrot.slane %v225, 4
    %v227 = vadd.f32 %v225, %v226
    %v228 = vrot.slane %v227, 2
    %v229 = vadd.f32 %v227, %v228
    %v230 = vrot.slane %v229, 1
    %v231 = vadd.f32 %v229, %v230
    %v232 = vmul.f32 %v231, %v125
    %v233 = vld [vmem:[%s7] sm:$0x1]
    %v234 = vadd.f32 %v232, 1e-05
    %v235 = vrsqrt.pop %v234
    %v236 = vmul.f32 %v235, %v234
    %v237 = vmul.f32 %v236, %v235
    %v238 = vmul.f32 0.5, %v237
    %v239 = vsub.f32 1.5, %v238
    %v240 = vmul.f32 %v235, %v239
    %vm241 = vweird.f32 %v234
    %vm242 = vweird.f32 %v235
    %vm243 = vmor %vm241, %vm242
    %v244 = vsel %vm243, %v235, %v240
    %v245 = vmul.f32 %v233, %v244
    %v247 = vperm.slane %v245, 0
    %v249 = vmul.f32 %v223, %v247
    %v250 = vld [vmem:[%s8] sm:$0x1]
    %v252 = vperm.slane %v250, 0
    %v254 = vadd.f32 %v249, %v252
    %v255 = vmax.f32 %v254, 0.0
    %v256 = vpack.c.bf16 %v255, %v255
    %v257 = vld [vmem:[%s9] sm:$0xf]
    %v258 = vld [vmem:[%s9 + $0x4] sm:$0xf]
    %v259 = vld [vmem:[%s9 + $0x8] sm:$0xf]
    %v260 = vld [vmem:[%s9 + $0xc] sm:$0xf]
    %v261 = vld [vmem:[%s10] sm:$0x1]
    %v263 = vperm.slane %v261, 0
    %v269 = vunpack.c.l.b16 %v257
    %v270 = vunpack.c.l.b16 %v258
    %v271 = vunpack.c.l.b16 %v259
    %v272 = vunpack.c.l.b16 %v260
    %v273 = vpack.c.b16 %v270, %v269
    %v274 = vpack.c.b16 %v272, %v271
    %vm277 = vcmask 261120
    %v279 = vsel %vm277, %v256, 0
    %281 = vmatpush.bf16.msra.mxu0 0
    %282 = vmatpush.bf16.msra.mxu0 0
    %283 = vmatpush.bf16.msra.mxu0 0
    %284 = vmatpush.bf16.msra.mxu0 0
    %285 = vmatpush.bf16.msra.mxu0 0
    %286 = vmatpush.bf16.msra.mxu0 0
    %287 = vmatpush.bf16.msra.mxu0 %v274
    %288 = vmatpush.bf16.msra.mxu0 %v273
    %289 = vmatmul.bf16.gmra.mxu0 %v279
    %v290 = vpop.f32.mrf.mxu0
    %v291 = vadd.f32 %v263, %v290
    %v292 = vpop.f32.mrf.mxu0
    %293 = vdwg.mxu0
    %vm294 = vcmask 123904
    %295 = vst.msk [vmem:[#allocation2] sm:$0x3] %vm294, %v291
    // Predicated region
    $region46: #{cnn3d_encoder_forward.5} parent=1 // pred_check
      _
    $region47: #{cnn3d_encoder_forward.5} parent=1 // pred_check_branch
      %297 = sbr.rel (0) target = $region49
    $region48: #{cnn3d_encoder_forward.5} parent=1 // pred_region
      %299 = vsyncadd [#allocation3], 0
      %s301 = sshll.u32 [#allocation2], 4
      %s302 = int_to_ptr.vmem [resolvable:$true] %s301
      %s303 = sshll.u32 %s11, 4
      %s304 = int_to_ptr.hbm [resolvable:$true] %s303
      %306 = dma.vmem_to_hbm [thread:$0]  %s302, 32, %s304, [#allocation3]
    $region49: #{cnn3d_encoder_forward.5} parent=1 // pred_fallthru
      _
    // Predicated region
    $region50: #{cnn3d_encoder_forward.5} parent=1 // pred_check
      _
    $region51: #{cnn3d_encoder_forward.5} parent=1 // pred_check_branch
      %308 = sbr.rel (0) target = $region53
    $region52: #{cnn3d_encoder_forward.5} parent=1 // pred_region
      %310 = dma.done [#allocation3], 32
    $region53: #{cnn3d_encoder_forward.5} parent=1 // pred_fallthru
      _
    %311 = vsyncpa [#allocation3], 1

</llo_original>
